<compile_context>
chip_gen: v6e
topology: v6e:2x2x1
jax: 0.10.0
libtpu: 0.0.40
codegen_flags: <defaults>
</compile_context>

<pallas_src>
import functools

import jax
import jax.numpy as jnp
from jax import lax
from jax.experimental import pallas as pl
from jax.experimental.pallas import tpu as pltpu

DIM = 32           # self.dim in MGLNet
NUM_CLUSTERS = 32  # num_clusters in MGLNet.__init__
_EPS = 1e-6


def _soft_assign_packed(xs, wpt_bd, bp):
    """xs: (2C, T) native dtype; wpt_bd: (2K, 2C) block-diag; bp: (2K, 1) f32.

    One 64-wide MXU matmul computes logits for both streams; the cluster
    softmax is applied per stream (rows [0,K) and [K,2K)). Returns (2K, T) f32.
    """
    k = NUM_CLUSTERS
    logits = jnp.dot(wpt_bd, xs, preferred_element_type=jnp.float32) + bp

    def _sm(l):
        m = jnp.max(l, axis=0, keepdims=True)
        e = jnp.exp(l - m)
        return e * pl.reciprocal(jnp.sum(e, axis=0, keepdims=True), approx=True)

    return jnp.concatenate([_sm(logits[:k]), _sm(logits[k:])], axis=0)


def _aggregate_kernel(x1_ref, x2_ref, wpt_ref, bp_ref, n_ref, d_ref):
    """Pass 1: packed soft assignment + node aggregation, accumulated over HW tiles."""
    t = pl.program_id(2)

    @pl.when(t == 0)
    def _init():
        n_ref[...] = jnp.zeros_like(n_ref)
        d_ref[...] = jnp.zeros_like(d_ref)

    xs = jnp.concatenate([x1_ref[...], x2_ref[...]], axis=0)      # (2C, T)
    a = _soft_assign_packed(xs, wpt_ref[...], bp_ref[...])        # (2K, T) f32
    # Packed node partial sum: contract the lane (spatial) axis of both
    # operands (NT form) -> no explicit transpose of the large tile.
    n_ref[...] += lax.dot_general(
        a.astype(xs.dtype), xs, (((1,), (1,)), ((), ())),
        preferred_element_type=jnp.float32)                       # (2K, 2C)
    d_ref[...] += jnp.sum(a, axis=1, keepdims=True)               # (2K, 1)


def _project_kernel(x1_ref, x2_ref, wpt_ref, bp_ref, m_ref, o1_ref, o2_ref):
    """Pass 2: recompute packed A, apply block-diag M, residual + ReLU."""
    c = DIM
    xs = jnp.concatenate([x1_ref[...], x2_ref[...]], axis=0)      # (2C, T)
    a = _soft_assign_packed(xs, wpt_ref[...], bp_ref[...])        # (2K, T) f32
    y = jnp.dot(m_ref[...], a.astype(xs.dtype),
                preferred_element_type=jnp.float32)               # (2C, T) f32
    o1_ref[...] = jnp.maximum(x1_ref[...] + y[:c], 0.0).astype(o1_ref.dtype)
    o2_ref[...] = jnp.maximum(x2_ref[...] + y[c:], 0.0).astype(o2_ref.dtype)


def _node_graph(n, d, wg):
    """Tiny per-batch node graph conv. n: (B, K, C); d: (B, K, 1)."""
    z = n / (d + _EPS)                                            # (B, K, C)
    adj = jax.nn.softmax(jnp.einsum('bkc,blc->bkl', z, z), axis=-1)
    agg = jnp.einsum('bkl,blc->bkc', adj, z)
    return jax.nn.relu(jnp.einsum('bkc,cd->bkd', agg, wg))


def init_params(key, dim=DIM, k=NUM_CLUSTERS):
    keys = jax.random.split(key, 8)
    s = 0.1
    return {
        "wp1": jax.random.normal(keys[0], (dim, k), jnp.float32) * s,
        "bp1": jnp.zeros((1, k), jnp.float32),
        "wp2": jax.random.normal(keys[1], (dim, k), jnp.float32) * s,
        "bp2": jnp.zeros((1, k), jnp.float32),
        "wg1": jax.random.normal(keys[2], (dim, dim), jnp.float32) * s,
        "wg2": jax.random.normal(keys[3], (dim, dim), jnp.float32) * s,
        "wc1": jax.random.normal(keys[4], (dim, dim), jnp.float32) * s,
        "wc2": jax.random.normal(keys[5], (dim, dim), jnp.float32) * s,
        "wo1": jax.random.normal(keys[6], (dim, dim), jnp.float32) * s,
        "wo2": jax.random.normal(keys[7], (dim, dim), jnp.float32) * s,
    }


def _pick_hw_tile(hw, target=8192):
    """Largest multiple of 128 dividing hw and <= target, else full hw."""
    if hw % 128 != 0 or hw <= 128:
        return hw
    t = min((target // 128) * 128, hw)
    while hw % t != 0:
        t -= 128
    return t


@functools.partial(jax.jit, static_argnames=("hw_tile",))
def mglnet_forward(x1, x2, params, hw_tile=None):
    """x1, x2: NCHW (B, 32, H, W). Returns (x1_out, x2_out) in NCHW."""
    B, C, H, W = x1.shape
    assert C == DIM
    HW = H * W
    K = NUM_CLUSTERS
    tile = hw_tile if hw_tile is not None else _pick_hw_tile(HW)
    assert HW % tile == 0
    n_tiles = HW // tile
    # Megacore-friendly split of the tile axis for pass 1 (helps B=1 on v7x).
    n_par = 2 if (n_tiles % 2 == 0 and n_tiles >= 2) else 1
    tpp = n_tiles // n_par

    dt = x1.dtype

    # NCHW -> (B, C, HW): pure reshape, spatial axis lands on TPU lanes.
    x1f = x1.reshape(B, C, HW)
    x2f = x2.reshape(B, C, HW)

    # Block-diagonal packed projection weights: one 64-wide MXU op serves both
    # streams. Weights are cast to the activation dtype (bf16-friendly).
    wpt_bd = jnp.zeros((2 * K, 2 * C), jnp.float32)
    wpt_bd = wpt_bd.at[:K, :C].set(params["wp1"].T).at[K:, C:].set(params["wp2"].T)
    wpt_bd = wpt_bd.astype(dt)
    bp_bd = jnp.concatenate(
        [params["bp1"].reshape(K, 1), params["bp2"].reshape(K, 1)],
        axis=0).astype(jnp.float32)                                 # (2K, 1)

    # ---- pass 1: packed assignment + node aggregation over HW tiles ----
    x_spec1 = pl.BlockSpec((None, C, tile), lambda b, p, t: (b, 0, p * tpp + t))
    wpt_spec1 = pl.BlockSpec((2 * K, 2 * C), lambda b, p, t: (0, 0))
    bp_spec1 = pl.BlockSpec((2 * K, 1), lambda b, p, t: (0, 0))
    n_spec = pl.BlockSpec((None, None, 2 * K, 2 * C), lambda b, p, t: (b, p, 0, 0))
    d_spec = pl.BlockSpec((None, None, 2 * K, 1), lambda b, p, t: (b, p, 0, 0))

    n_par_acc, d_par_acc = pl.pallas_call(
        _aggregate_kernel,
        out_shape=(
            jax.ShapeDtypeStruct((B, n_par, 2 * K, 2 * C), jnp.float32),
            jax.ShapeDtypeStruct((B, n_par, 2 * K, 1), jnp.float32),
        ),
        grid_spec=pltpu.PrefetchScalarGridSpec(
            num_scalar_prefetch=0,
            grid=(B, n_par, tpp),
            in_specs=[x_spec1, x_spec1, wpt_spec1, bp_spec1],
            out_specs=[n_spec, d_spec],
        ),
        compiler_params=pltpu.CompilerParams(
            dimension_semantics=("parallel", "parallel", "arbitrary"),
            vmem_limit_bytes=32 * 1024 * 1024),
    )(x1f, x2f, wpt_bd, bp_bd)

    # Reduce the megacore partials (tiny).
    n_pk = jnp.sum(n_par_acc, axis=1)     # (B, 2K, 2C)
    d_pk = jnp.sum(d_par_acc, axis=1)     # (B, 2K, 1)

    # ---- node-level graph math, hoisted out of the kernels (B x 32 x 32) ----
    n1, n2 = n_pk[:, :K, :C], n_pk[:, K:, C:]
    d1, d2 = d_pk[:, :K], d_pk[:, K:]
    z1g = _node_graph(n1, d1, params["wg1"])
    z2g = _node_graph(n2, d2, params["wg2"])
    # Mutual cross-graph interaction.
    z1m = z1g + jax.nn.relu(jnp.einsum('bkc,cd->bkd', z2g, params["wc1"]))
    z2m = z2g + jax.nn.relu(jnp.einsum('bkc,cd->bkd', z1g, params["wc2"]))
    # Reassociated re-projection: y^T = M @ A with M = (Zm @ Wo)^T (B, C, K).
    m1 = jnp.einsum('bkc,cd->bdk', z1m, params["wo1"])
    m2 = jnp.einsum('bkc,cd->bdk', z2m, params["wo2"])
    mbd = jnp.zeros((B, 2 * C, 2 * K), jnp.float32)
    mbd = mbd.at[:, :C, :K].set(m1).at[:, C:, K:].set(m2).astype(dt)

    # ---- pass 2: per-tile re-projection + residual (fully parallel) ----
    x_spec2 = pl.BlockSpec((None, C, tile), lambda b, t: (b, 0, t))
    wpt_spec2 = pl.BlockSpec((2 * K, 2 * C), lambda b, t: (0, 0))
    bp_spec2 = pl.BlockSpec((2 * K, 1), lambda b, t: (0, 0))
    m_spec = pl.BlockSpec((None, 2 * C, 2 * K), lambda b, t: (b, 0, 0))

    o1f, o2f = pl.pallas_call(
        _project_kernel,
        out_shape=(
            jax.ShapeDtypeStruct((B, C, HW), dt),
            jax.ShapeDtypeStruct((B, C, HW), dt),
        ),
        grid_spec=pltpu.PrefetchScalarGridSpec(
            num_scalar_prefetch=0,
            grid=(B, n_tiles),
            in_specs=[x_spec2, x_spec2, wpt_spec2, bp_spec2, m_spec],
            out_specs=[x_spec2, x_spec2],
        ),
        compiler_params=pltpu.CompilerParams(
            dimension_semantics=("parallel", "parallel"),
            vmem_limit_bytes=32 * 1024 * 1024),
    )(x1f, x2f, wpt_bd, bp_bd, mbd)

    # (B, C, HW) -> NCHW: pure reshape, no transpose.
    return o1f.reshape(B, C, H, W), o2f.reshape(B, C, H, W)


if __name__ == "__main__":
    key = jax.random.PRNGKey(0)
    kx1, kx2, kp = jax.random.split(key, 3)

    B, C, H, W = 2, DIM, 16, 16   # dim is fixed to 32 by MGLNet.__init__
    x1 = jax.random.normal(kx1, (B, C, H, W), jnp.float32)
    x2 = jax.random.normal(kx2, (B, C, H, W), jnp.float32)
    params = init_params(kp)

    # hw_tile=128 exercises the tiled/accumulating path with the megacore
    # split (HW = 256 -> 2 tiles -> n_par = 2).
    y1, y2 = mglnet_forward(x1, x2, params, hw_tile=128)
    jax.block_until_ready((y1, y2))

    # Default tiling path (single full-HW tile).
    z1, z2 = mglnet_forward(x1, x2, params)
    jax.block_until_ready((z1, z2))

    assert y1.shape == (B, C, H, W) and y2.shape == (B, C, H, W)
    assert y1.dtype == jnp.float32 and y2.dtype == jnp.float32
    assert bool(jnp.all(jnp.isfinite(y1))) and bool(jnp.all(jnp.isfinite(y2)))
    assert bool(jnp.allclose(y1, z1, atol=1e-4, rtol=1e-4))
    assert bool(jnp.allclose(y2, z2, atol=1e-4, rtol=1e-4))
    print("KERNEL_OK")
</pallas_src>

<mosaic_0001>
module attributes {stable_mosaic.version = 11 : i64} {
  func.func @_aggregate_kernel(%arg0: i32, %arg1: i32, %arg2: i32, %arg3: memref<1x32x128xf32, #tpu.memory_space<vmem>>, %arg4: memref<1x32x128xf32, #tpu.memory_space<vmem>>, %arg5: memref<64x64xf32, #tpu.memory_space<vmem>>, %arg6: memref<64x1xf32, #tpu.memory_space<vmem>>, %arg7: memref<1x1x64x64xf32, #tpu.memory_space<vmem>>, %arg8: memref<1x1x64x1xf32, #tpu.memory_space<vmem>>) attributes {dimension_semantics = [#tpu.dimension_semantics<parallel>, #tpu.dimension_semantics<parallel>, #tpu.dimension_semantics<arbitrary>], iteration_bounds = array<i64: 2, 2, 1>, scalar_prefetch = 0 : i64, scratch_operands = 0 : i64, tpu.core_type = #tpu.core_type<tc>, window_params = [{transform_indices = @transform_0, window_bounds = array<i64: 1, 32, 128>}, {transform_indices = @transform_1, window_bounds = array<i64: 1, 32, 128>}, {pipeline_mode = #tpu.pipeline_mode<synchronous>, transform_indices = @transform_2, window_bounds = array<i64: 64, 64>}, {pipeline_mode = #tpu.pipeline_mode<synchronous>, transform_indices = @transform_3, window_bounds = array<i64: 64, 1>}, {transform_indices = @transform_4, window_bounds = array<i64: 1, 1, 64, 64>}, {transform_indices = @transform_5, window_bounds = array<i64: 1, 1, 64, 1>}]} {
    %c0_i32 = arith.constant 0 : i32
    %0 = arith.cmpi eq, %arg2, %c0_i32 : i32
    %1 = arith.extui %0 : i1 to i32
    %c0_i32_0 = arith.constant 0 : i32
    %2 = arith.cmpi ne, %1, %c0_i32_0 : i32
    scf.if %2 {
      %cst_32 = arith.constant 0.000000e+00 : f32
      %51 = vector.broadcast %cst_32 : f32 to vector<64x64xf32>
      %c0_33 = arith.constant 0 : index
      %c0_34 = arith.constant 0 : index
      %c0_35 = arith.constant 0 : index
      %c0_36 = arith.constant 0 : index
      %52 = vector.load %arg7[%c0_33, %c0_34, %c0_35, %c0_36] : memref<1x1x64x64xf32, #tpu.memory_space<vmem>>, vector<1x1x64x64xf32>
      %53 = vector.shape_cast %52 : vector<1x1x64x64xf32> to vector<64x64xf32>
      %54 = vector.shape_cast %51 : vector<64x64xf32> to vector<1x1x64x64xf32>
      tpu.vector_store %arg7[%c0_33, %c0_34, %c0_35, %c0_36], %54 {strides = array<i32>} : memref<1x1x64x64xf32, #tpu.memory_space<vmem>>, vector<1x1x64x64xf32>,
      %cst_37 = arith.constant 0.000000e+00 : f32
      %55 = vector.broadcast %cst_37 : f32 to vector<64x1xf32>
      %c0_38 = arith.constant 0 : index
      %c0_39 = arith.constant 0 : index
      %c0_40 = arith.constant 0 : index
      %c0_41 = arith.constant 0 : index
      %56 = vector.load %arg8[%c0_38, %c0_39, %c0_40, %c0_41] : memref<1x1x64x1xf32, #tpu.memory_space<vmem>>, vector<1x1x64x1xf32>
      %57 = vector.shape_cast %56 : vector<1x1x64x1xf32> to vector<64x1xf32>
      %58 = vector.shape_cast %55 : vector<64x1xf32> to vector<1x1x64x1xf32>
      tpu.vector_store %arg8[%c0_38, %c0_39, %c0_40, %c0_41], %58 {strides = array<i32>} : memref<1x1x64x1xf32, #tpu.memory_space<vmem>>, vector<1x1x64x1xf32>,
    } else {
    }
    %c0 = arith.constant 0 : index
    %c0_1 = arith.constant 0 : index
    %c0_2 = arith.constant 0 : index
    %3 = vector.load %arg3[%c0, %c0_1, %c0_2] : memref<1x32x128xf32, #tpu.memory_space<vmem>>, vector<1x32x128xf32>
    %4 = vector.shape_cast %3 : vector<1x32x128xf32> to vector<32x128xf32>
    %c0_3 = arith.constant 0 : index
    %c0_4 = arith.constant 0 : index
    %c0_5 = arith.constant 0 : index
    %5 = vector.load %arg4[%c0_3, %c0_4, %c0_5] : memref<1x32x128xf32, #tpu.memory_space<vmem>>, vector<1x32x128xf32>
    %6 = vector.shape_cast %5 : vector<1x32x128xf32> to vector<32x128xf32>
    %7 = tpu.concatenate %4, %6 in 0 : vector<32x128xf32>, vector<32x128xf32> -> vector<64x128xf32>
    %c0_6 = arith.constant 0 : index
    %c0_7 = arith.constant 0 : index
    %8 = vector.load %arg5[%c0_6, %c0_7] : memref<64x64xf32, #tpu.memory_space<vmem>>, vector<64x64xf32>
    %c0_8 = arith.constant 0 : index
    %c0_9 = arith.constant 0 : index
    %9 = vector.load %arg6[%c0_8, %c0_9] : memref<64x1xf32, #tpu.memory_space<vmem>>, vector<64x1xf32>
    %cst = arith.constant dense<0.000000e+00> : vector<64x128xf32>
    %10 = tpu.matmul %8, %7, %cst {dimension_numbers = #tpu.dot_dimension_numbers<[1], [0], [0], [1], [0, 0, 1, 1], [], []>} : vector<64x64xf32>, vector<64x128xf32>, vector<64x128xf32> -> vector<64x128xf32>
    %11 = vector.broadcast %9 : vector<64x1xf32> to vector<64x128xf32>
    %12 = arith.addf %10, %11 : vector<64x128xf32>
    %13 = vector.extract_strided_slice %12 {offsets = [0, 0], sizes = [32, 128], strides = [1, 1]} : vector<64x128xf32> to vector<32x128xf32>
    %cst_10 = arith.constant dense<0xFF800000> : vector<128xf32>
    %14 = vector.multi_reduction <maximumf>, %13, %cst_10 [0] : vector<32x128xf32> to vector<128xf32>
    %15 = vector.shape_cast %14 : vector<128xf32> to vector<1x128xf32>
    %16 = vector.broadcast %15 : vector<1x128xf32> to vector<32x128xf32>
    %17 = arith.subf %13, %16 : vector<32x128xf32>
    %18 = math.exp %17 : vector<32x128xf32>
    %cst_11 = arith.constant dense<0.000000e+00> : vector<128xf32>
    %19 = vector.multi_reduction <add>, %18, %cst_11 [0] : vector<32x128xf32> to vector<128xf32>
    %20 = vector.shape_cast %19 : vector<128xf32> to vector<1x128xf32>
    %21 = tpu.reciprocal %20 {approx = true} : vector<1x128xf32> -> vector<1x128xf32>
    %22 = vector.broadcast %21 : vector<1x128xf32> to vector<32x128xf32>
    %23 = arith.mulf %18, %22 : vector<32x128xf32>
    %24 = vector.extract_strided_slice %12 {offsets = [32, 0], sizes = [32, 128], strides = [1, 1]} : vector<64x128xf32> to vector<32x128xf32>
    %cst_12 = arith.constant dense<0xFF800000> : vector<128xf32>
    %25 = vector.multi_reduction <maximumf>, %24, %cst_12 [0] : vector<32x128xf32> to vector<128xf32>
    %26 = vector.shape_cast %25 : vector<128xf32> to vector<1x128xf32>
    %27 = vector.broadcast %26 : vector<1x128xf32> to vector<32x128xf32>
    %28 = arith.subf %24, %27 : vector<32x128xf32>
    %29 = math.exp %28 : vector<32x128xf32>
    %cst_13 = arith.constant dense<0.000000e+00> : vector<128xf32>
    %30 = vector.multi_reduction <add>, %29, %cst_13 [0] : vector<32x128xf32> to vector<128xf32>
    %31 = vector.shape_cast %30 : vector<128xf32> to vector<1x128xf32>
    %32 = tpu.reciprocal %31 {approx = true} : vector<1x128xf32> -> vector<1x128xf32>
    %33 = vector.broadcast %32 : vector<1x128xf32> to vector<32x128xf32>
    %34 = arith.mulf %29, %33 : vector<32x128xf32>
    %35 = tpu.concatenate %23, %34 in 0 : vector<32x128xf32>, vector<32x128xf32> -> vector<64x128xf32>
    %c0_14 = arith.constant 0 : index
    %c0_15 = arith.constant 0 : index
    %c0_16 = arith.constant 0 : index
    %c0_17 = arith.constant 0 : index
    %36 = vector.load %arg7[%c0_14, %c0_15, %c0_16, %c0_17] : memref<1x1x64x64xf32, #tpu.memory_space<vmem>>, vector<1x1x64x64xf32>
    %37 = vector.shape_cast %36 : vector<1x1x64x64xf32> to vector<64x64xf32>
    %cst_18 = arith.constant dense<0.000000e+00> : vector<64x64xf32>
    %38 = tpu.matmul %35, %7, %cst_18 {dimension_numbers = #tpu.dot_dimension_numbers<[1], [1], [0], [0], [0, 0, 1, 0], [], []>} : vector<64x128xf32>, vector<64x128xf32>, vector<64x64xf32> -> vector<64x64xf32>
    %39 = arith.addf %37, %38 : vector<64x64xf32>
    %c0_19 = arith.constant 0 : index
    %c0_20 = arith.constant 0 : index
    %c0_21 = arith.constant 0 : index
    %c0_22 = arith.constant 0 : index
    %40 = vector.load %arg7[%c0_19, %c0_20, %c0_21, %c0_22] : memref<1x1x64x64xf32, #tpu.memory_space<vmem>>, vector<1x1x64x64xf32>
    %41 = vector.shape_cast %40 : vector<1x1x64x64xf32> to vector<64x64xf32>
    %42 = vector.shape_cast %39 : vector<64x64xf32> to vector<1x1x64x64xf32>
    tpu.vector_store %arg7[%c0_19, %c0_20, %c0_21, %c0_22], %42 {strides = array<i32>} : memref<1x1x64x64xf32, #tpu.memory_space<vmem>>, vector<1x1x64x64xf32>,
    %c0_23 = arith.constant 0 : index
    %c0_24 = arith.constant 0 : index
    %c0_25 = arith.constant 0 : index
    %c0_26 = arith.constant 0 : index
    %43 = vector.load %arg8[%c0_23, %c0_24, %c0_25, %c0_26] : memref<1x1x64x1xf32, #tpu.memory_space<vmem>>, vector<1x1x64x1xf32>
    %44 = vector.shape_cast %43 : vector<1x1x64x1xf32> to vector<64x1xf32>
    %cst_27 = arith.constant dense<0.000000e+00> : vector<64xf32>
    %45 = vector.multi_reduction <add>, %35, %cst_27 [1] : vector<64x128xf32> to vector<64xf32>
    %46 = vector.shape_cast %45 : vector<64xf32> to vector<64x1xf32>
    %47 = arith.addf %44, %46 : vector<64x1xf32>
    %c0_28 = arith.constant 0 : index
    %c0_29 = arith.constant 0 : index
    %c0_30 = arith.constant 0 : index
    %c0_31 = arith.constant 0 : index
    %48 = vector.load %arg8[%c0_28, %c0_29, %c0_30, %c0_31] : memref<1x1x64x1xf32, #tpu.memory_space<vmem>>, vector<1x1x64x1xf32>
    %49 = vector.shape_cast %48 : vector<1x1x64x1xf32> to vector<64x1xf32>
    %50 = vector.shape_cast %47 : vector<64x1xf32> to vector<1x1x64x1xf32>
    tpu.vector_store %arg8[%c0_28, %c0_29, %c0_30, %c0_31], %50 {strides = array<i32>} : memref<1x1x64x1xf32, #tpu.memory_space<vmem>>, vector<1x1x64x1xf32>,
    return
  }
  func.func @transform_0(%arg0: i32, %arg1: i32, %arg2: i32) -> (i32, i32, i32) {
    %c1_i32 = arith.constant 1 : i32
    %0 = arith.muli %arg1, %c1_i32 : i32
    %1 = arith.addi %0, %arg2 : i32
    %c0_i32 = arith.constant 0 : i32
    %c0_i32_0 = arith.constant 0 : i32
    return %arg0, %c0_i32, %1 : i32, i32, i32
  }
  func.func @transform_1(%arg0: i32, %arg1: i32, %arg2: i32) -> (i32, i32, i32) {
    %c1_i32 = arith.constant 1 : i32
    %0 = arith.muli %arg1, %c1_i32 : i32
    %1 = arith.addi %0, %arg2 : i32
    %c0_i32 = arith.constant 0 : i32
    %c0_i32_0 = arith.constant 0 : i32
    return %arg0, %c0_i32, %1 : i32, i32, i32
  }
  func.func @transform_2(%arg0: i32, %arg1: i32, %arg2: i32) -> (i32, i32) {
    %c0_i32 = arith.constant 0 : i32
    %c0_i32_0 = arith.constant 0 : i32
    %c0_i32_1 = arith.constant 0 : i32
    return %c0_i32, %c0_i32_0 : i32, i32
  }
  func.func @transform_3(%arg0: i32, %arg1: i32, %arg2: i32) -> (i32, i32) {
    %c0_i32 = arith.constant 0 : i32
    %c0_i32_0 = arith.constant 0 : i32
    %c0_i32_1 = arith.constant 0 : i32
    return %c0_i32, %c0_i32_0 : i32, i32
  }
  func.func @transform_4(%arg0: i32, %arg1: i32, %arg2: i32) -> (i32, i32, i32, i32) {
    %c0_i32 = arith.constant 0 : i32
    %c0_i32_0 = arith.constant 0 : i32
    %c0_i32_1 = arith.constant 0 : i32
    return %arg0, %arg1, %c0_i32, %c0_i32_0 : i32, i32, i32, i32
  }
  func.func @transform_5(%arg0: i32, %arg1: i32, %arg2: i32) -> (i32, i32, i32, i32) {
    %c0_i32 = arith.constant 0 : i32
    %c0_i32_0 = arith.constant 0 : i32
    %c0_i32_1 = arith.constant 0 : i32
    return %arg0, %arg1, %c0_i32, %c0_i32_0 : i32, i32, i32, i32
  }
}

module attributes {stable_mosaic.version = 11 : i64} {
  func.func @_project_kernel(%arg0: i32, %arg1: i32, %arg2: memref<1x32x128xf32, #tpu.memory_space<vmem>>, %arg3: memref<1x32x128xf32, #tpu.memory_space<vmem>>, %arg4: memref<64x64xf32, #tpu.memory_space<vmem>>, %arg5: memref<64x1xf32, #tpu.memory_space<vmem>>, %arg6: memref<1x64x64xf32, #tpu.memory_space<vmem>>, %arg7: memref<1x32x128xf32, #tpu.memory_space<vmem>>, %arg8: memref<1x32x128xf32, #tpu.memory_space<vmem>>) attributes {dimension_semantics = [#tpu.dimension_semantics<parallel>, #tpu.dimension_semantics<parallel>], iteration_bounds = array<i64: 2, 2>, scalar_prefetch = 0 : i64, scratch_operands = 0 : i64, tpu.core_type = #tpu.core_type<tc>, window_params = [{transform_indices = @transform_0, window_bounds = array<i64: 1, 32, 128>}, {transform_indices = @transform_1, window_bounds = array<i64: 1, 32, 128>}, {pipeline_mode = #tpu.pipeline_mode<synchronous>, transform_indices = @transform_2, window_bounds = array<i64: 64, 64>}, {pipeline_mode = #tpu.pipeline_mode<synchronous>, transform_indices = @transform_3, window_bounds = array<i64: 64, 1>}, {transform_indices = @transform_4, window_bounds = array<i64: 1, 64, 64>}, {transform_indices = @transform_5, window_bounds = array<i64: 1, 32, 128>}, {transform_indices = @transform_6, window_bounds = array<i64: 1, 32, 128>}]} {
    %c0 = arith.constant 0 : index
    %c0_0 = arith.constant 0 : index
    %c0_1 = arith.constant 0 : index
    %0 = vector.load %arg2[%c0, %c0_0, %c0_1] : memref<1x32x128xf32, #tpu.memory_space<vmem>>, vector<1x32x128xf32>
    %1 = vector.shape_cast %0 : vector<1x32x128xf32> to vector<32x128xf32>
    %c0_2 = arith.constant 0 : index
    %c0_3 = arith.constant 0 : index
    %c0_4 = arith.constant 0 : index
    %2 = vector.load %arg3[%c0_2, %c0_3, %c0_4] : memref<1x32x128xf32, #tpu.memory_space<vmem>>, vector<1x32x128xf32>
    %3 = vector.shape_cast %2 : vector<1x32x128xf32> to vector<32x128xf32>
    %4 = tpu.concatenate %1, %3 in 0 : vector<32x128xf32>, vector<32x128xf32> -> vector<64x128xf32>
    %c0_5 = arith.constant 0 : index
    %c0_6 = arith.constant 0 : index
    %5 = vector.load %arg4[%c0_5, %c0_6] : memref<64x64xf32, #tpu.memory_space<vmem>>, vector<64x64xf32>
    %c0_7 = arith.constant 0 : index
    %c0_8 = arith.constant 0 : index
    %6 = vector.load %arg5[%c0_7, %c0_8] : memref<64x1xf32, #tpu.memory_space<vmem>>, vector<64x1xf32>
    %cst = arith.constant dense<0.000000e+00> : vector<64x128xf32>
    %7 = tpu.matmul %5, %4, %cst {dimension_numbers = #tpu.dot_dimension_numbers<[1], [0], [0], [1], [0, 0, 1, 1], [], []>} : vector<64x64xf32>, vector<64x128xf32>, vector<64x128xf32> -> vector<64x128xf32>
    %8 = vector.broadcast %6 : vector<64x1xf32> to vector<64x128xf32>
    %9 = arith.addf %7, %8 : vector<64x128xf32>
    %10 = vector.extract_strided_slice %9 {offsets = [0, 0], sizes = [32, 128], strides = [1, 1]} : vector<64x128xf32> to vector<32x128xf32>
    %cst_9 = arith.constant dense<0xFF800000> : vector<128xf32>
    %11 = vector.multi_reduction <maximumf>, %10, %cst_9 [0] : vector<32x128xf32> to vector<128xf32>
    %12 = vector.shape_cast %11 : vector<128xf32> to vector<1x128xf32>
    %13 = vector.broadcast %12 : vector<1x128xf32> to vector<32x128xf32>
    %14 = arith.subf %10, %13 : vector<32x128xf32>
    %15 = math.exp %14 : vector<32x128xf32>
    %cst_10 = arith.constant dense<0.000000e+00> : vector<128xf32>
    %16 = vector.multi_reduction <add>, %15, %cst_10 [0] : vector<32x128xf32> to vector<128xf32>
    %17 = vector.shape_cast %16 : vector<128xf32> to vector<1x128xf32>
    %18 = tpu.reciprocal %17 {approx = true} : vector<1x128xf32> -> vector<1x128xf32>
    %19 = vector.broadcast %18 : vector<1x128xf32> to vector<32x128xf32>
    %20 = arith.mulf %15, %19 : vector<32x128xf32>
    %21 = vector.extract_strided_slice %9 {offsets = [32, 0], sizes = [32, 128], strides = [1, 1]} : vector<64x128xf32> to vector<32x128xf32>
    %cst_11 = arith.constant dense<0xFF800000> : vector<128xf32>
    %22 = vector.multi_reduction <maximumf>, %21, %cst_11 [0] : vector<32x128xf32> to vector<128xf32>
    %23 = vector.shape_cast %22 : vector<128xf32> to vector<1x128xf32>
    %24 = vector.broadcast %23 : vector<1x128xf32> to vector<32x128xf32>
    %25 = arith.subf %21, %24 : vector<32x128xf32>
    %26 = math.exp %25 : vector<32x128xf32>
    %cst_12 = arith.constant dense<0.000000e+00> : vector<128xf32>
    %27 = vector.multi_reduction <add>, %26, %cst_12 [0] : vector<32x128xf32> to vector<128xf32>
    %28 = vector.shape_cast %27 : vector<128xf32> to vector<1x128xf32>
    %29 = tpu.reciprocal %28 {approx = true} : vector<1x128xf32> -> vector<1x128xf32>
    %30 = vector.broadcast %29 : vector<1x128xf32> to vector<32x128xf32>
    %31 = arith.mulf %26, %30 : vector<32x128xf32>
    %32 = tpu.concatenate %20, %31 in 0 : vector<32x128xf32>, vector<32x128xf32> -> vector<64x128xf32>
    %c0_13 = arith.constant 0 : index
    %c0_14 = arith.constant 0 : index
    %c0_15 = arith.constant 0 : index
    %33 = vector.load %arg6[%c0_13, %c0_14, %c0_15] : memref<1x64x64xf32, #tpu.memory_space<vmem>>, vector<1x64x64xf32>
    %34 = vector.shape_cast %33 : vector<1x64x64xf32> to vector<64x64xf32>
    %cst_16 = arith.constant dense<0.000000e+00> : vector<64x128xf32>
    %35 = tpu.matmul %34, %32, %cst_16 {dimension_numbers = #tpu.dot_dimension_numbers<[1], [0], [0], [1], [0, 0, 1, 1], [], []>} : vector<64x64xf32>, vector<64x128xf32>, vector<64x128xf32> -> vector<64x128xf32>
    %c0_17 = arith.constant 0 : index
    %c0_18 = arith.constant 0 : index
    %c0_19 = arith.constant 0 : index
    %36 = vector.load %arg2[%c0_17, %c0_18, %c0_19] : memref<1x32x128xf32, #tpu.memory_space<vmem>>, vector<1x32x128xf32>
    %37 = vector.shape_cast %36 : vector<1x32x128xf32> to vector<32x128xf32>
    %38 = vector.extract_strided_slice %35 {offsets = [0, 0], sizes = [32, 128], strides = [1, 1]} : vector<64x128xf32> to vector<32x128xf32>
    %39 = arith.addf %37, %38 : vector<32x128xf32>
    %cst_20 = arith.constant 0.000000e+00 : f32
    %40 = vector.broadcast %cst_20 : f32 to vector<32x128xf32>
    %41 = arith.maximumf %39, %40 : vector<32x128xf32>
    %c0_21 = arith.constant 0 : index
    %c0_22 = arith.constant 0 : index
    %c0_23 = arith.constant 0 : index
    %42 = vector.load %arg7[%c0_21, %c0_22, %c0_23] : memref<1x32x128xf32, #tpu.memory_space<vmem>>, vector<1x32x128xf32>
    %43 = vector.shape_cast %42 : vector<1x32x128xf32> to vector<32x128xf32>
    %44 = vector.shape_cast %41 : vector<32x128xf32> to vector<1x32x128xf32>
    tpu.vector_store %arg7[%c0_21, %c0_22, %c0_23], %44 {strides = array<i32>} : memref<1x32x128xf32, #tpu.memory_space<vmem>>, vector<1x32x128xf32>,
    %c0_24 = arith.constant 0 : index
    %c0_25 = arith.constant 0 : index
    %c0_26 = arith.constant 0 : index
    %45 = vector.load %arg3[%c0_24, %c0_25, %c0_26] : memref<1x32x128xf32, #tpu.memory_space<vmem>>, vector<1x32x128xf32>
    %46 = vector.shape_cast %45 : vector<1x32x128xf32> to vector<32x128xf32>
    %47 = vector.extract_strided_slice %35 {offsets = [32, 0], sizes = [32, 128], strides = [1, 1]} : vector<64x128xf32> to vector<32x128xf32>
    %48 = arith.addf %46, %47 : vector<32x128xf32>
    %cst_27 = arith.constant 0.000000e+00 : f32
    %49 = vector.broadcast %cst_27 : f32 to vector<32x128xf32>
    %50 = arith.maximumf %48, %49 : vector<32x128xf32>
    %c0_28 = arith.constant 0 : index
    %c0_29 = arith.constant 0 : index
    %c0_30 = arith.constant 0 : index
    %51 = vector.load %arg8[%c0_28, %c0_29, %c0_30] : memref<1x32x128xf32, #tpu.memory_space<vmem>>, vector<1x32x128xf32>
    %52 = vector.shape_cast %51 : vector<1x32x128xf32> to vector<32x128xf32>
    %53 = vector.shape_cast %50 : vector<32x128xf32> to vector<1x32x128xf32>
    tpu.vector_store %arg8[%c0_28, %c0_29, %c0_30], %53 {strides = array<i32>} : memref<1x32x128xf32, #tpu.memory_space<vmem>>, vector<1x32x128xf32>,
    return
  }
  func.func @transform_0(%arg0: i32, %arg1: i32) -> (i32, i32, i32) {
    %c0_i32 = arith.constant 0 : i32
    %c0_i32_0 = arith.constant 0 : i32
    return %arg0, %c0_i32, %arg1 : i32, i32, i32
  }
  func.func @transform_1(%arg0: i32, %arg1: i32) -> (i32, i32, i32) {
    %c0_i32 = arith.constant 0 : i32
    %c0_i32_0 = arith.constant 0 : i32
    return %arg0, %c0_i32, %arg1 : i32, i32, i32
  }
  func.func @transform_2(%arg0: i32, %arg1: i32) -> (i32, i32) {
    %c0_i32 = arith.constant 0 : i32
    %c0_i32_0 = arith.constant 0 : i32
    %c0_i32_1 = arith.constant 0 : i32
    return %c0_i32, %c0_i32_0 : i32, i32
  }
  func.func @transform_3(%arg0: i32, %arg1: i32) -> (i32, i32) {
    %c0_i32 = arith.constant 0 : i32
    %c0_i32_0 = arith.constant 0 : i32
    %c0_i32_1 = arith.constant 0 : i32
    return %c0_i32, %c0_i32_0 : i32, i32
  }
  func.func @transform_4(%arg0: i32, %arg1: i32) -> (i32, i32, i32) {
    %c0_i32 = arith.constant 0 : i32
    %c0_i32_0 = arith.constant 0 : i32
    %c0_i32_1 = arith.constant 0 : i32
    return %arg0, %c0_i32, %c0_i32_0 : i32, i32, i32
  }
  func.func @transform_5(%arg0: i32, %arg1: i32) -> (i32, i32, i32) {
    %c0_i32 = arith.constant 0 : i32
    %c0_i32_0 = arith.constant 0 : i32
    return %arg0, %c0_i32, %arg1 : i32, i32, i32
  }
  func.func @transform_6(%arg0: i32, %arg1: i32) -> (i32, i32, i32) {
    %c0_i32 = arith.constant 0 : i32
    %c0_i32_0 = arith.constant 0 : i32
    return %arg0, %c0_i32, %arg1 : i32, i32, i32
  }
}

</mosaic_0001>

<llo_original>
// kernel: mglnet_forward.2
$region0: #{mglnet_forward.2}
  #allocation0 [shape = 'u32[]', space=smem, size = 0x4, offset = 0x4, fixed_abs, tag = 'smem constant byte address 0x4 - core index']
  #allocation1 [shape = 'u32[144,128]{1,0:T(1,128)}', space=vmem, size = 0x12000, scoped, tag = 'internal scratch']
  %s0 = inlined_call_operand.vmem [shape: f32[2,32,256], index: 0, kind: input, shape index: {}]
  %s1 = inlined_call_operand.vmem [shape: f32[2,32,256], index: 1, kind: input, shape index: {}]
  %s2 = inlined_call_operand.vmem [shape: f32[64,64], index: 2, kind: input, shape index: {}]
  %s3 = inlined_call_operand.vmem [shape: f32[64,1], index: 3, kind: input, shape index: {}]
  %s4 = inlined_call_operand.vmem [shape: f32[2,2,64,64], index: 4, kind: output, shape index: {0}]
  %s5 = inlined_call_operand.vmem [shape: f32[2,2,64,1], index: 5, kind: output, shape index: {1}]
  %6 = xla_tuple %s4, %s5
  %s7 = sld [smem:[#allocation0]]
  $region137: #{mglnet_forward.2} parent=0
    _
  %s9 = ssub.s32 1, %s7
  %s10 = scalar_select 0, %s9, %s7
  $region1: #{mglnet_forward.2} parent=0
    #allocation2 [shape = 'u8[32768]{0}', space=vmem, size = 0x8000, scoped, tag = 'input window, operand 0']
    #allocation3 [shape = 'u8[32768]{0}', space=vmem, size = 0x8000, scoped, tag = 'input window, operand 1']
    loop: start=0, step=1, limit=6
    $region2: #{mglnet_forward.2} parent=1 // loop_pre_header
      _
    $region3: #{mglnet_forward.2} parent=1 // loop_header
      %s12 = sphi 0, %s16
      %p13 = scmp.ge.s32.totalorder %s12, 6
      %s19 = sphi 0, %s38
      %s20 = sphi 0, %s34
      %s21 = sphi 0, %s30
      %s22 = sphi 0, %s19
      %s23 = sphi 0, %s20
      %s24 = sphi 0, %s21
      %s25 = sphi 0, %s22
      %s26 = sphi 0, %s23
      %s27 = sphi 0, %s24
      %s45 = sphi 0, %s47
      %s48 = sphi 0, %s45
      %s49 = sphi 0, %s48
      %s65 = sphi 0, %s49
      %s75 = sphi 0, %s77
      %s78 = sphi 0, %s75
      %s79 = sphi 0, %s78
      %s95 = sphi 0, %s79
      %s99 = sphi 0, %s99
      %s101 = sphi 0, %s99
      %s102 = sphi 0, %s101
      %s116 = sphi 0, %s102
      %s120 = sphi 0, %s120
      %s122 = sphi 0, %s120
      %s123 = sphi 0, %s122
      %s137 = sphi 0, %s123
      %s145 = sphi 0, %s147
      %s148 = sphi 0, %s145
      %s149 = sphi 0, %s148
      %s165 = sphi 0, %s149
      %s173 = sphi 0, %s175
      %s176 = sphi 0, %s173
      %s177 = sphi 0, %s176
      %s193 = sphi 0, %s177
    $region4: #{mglnet_forward.2} parent=1 // loop_header_branch
      %15 = sbr.rel (%p13) target = $region8
    $region5: #{mglnet_forward.2} parent=1 // loop_body
      %s17 = ssub.s32 %s12, 1
      %s18 = ssub.s32 %s12, 2
      %s28 = sadd.s32 1, %s21
      %p29 = scmp.ge.s32.totalorder %s28, 1
      %s30 = scalar_select %p29, 0, %s28
      %s31 = sadd.s32 1, %s20
      %s32 = scalar_select %p29, %s31, %s20
      %p33 = scmp.ge.s32.totalorder %s32, 2
      %s34 = scalar_select %p33, 0, %s32
      %s35 = sadd.s32 1, %s19
      %s36 = scalar_select %p33, %s35, %s19
      %p37 = scmp.ge.s32.totalorder %s36, 2
      %s38 = scalar_select %p37, 0, %s36
      %s39 = sadd.s32 %s20, %s21
      %s40 = sadd.s32 %s34, %s30
      %s41 = ssub.s32 %s19, %s38
      %s42 = ssub.s32 %s39, %s40
      %s43 = sor.u32 %s41, %s42
      %p44 = scmp.eq.s32.totalorder %s43, 0
      %s46 = sadd.s32 %s45, 1
      %s47 = scalar_select %p44, %s45, %s46
      %p50 = pneg %p44
      %p51 = scmp.eq.s32.totalorder %s12, 3
      %p52 = por %p50, %p51
      %p53 = scmp.ne.s32.totalorder %s45, %s48
      %p54 = scmp.eq.s32.totalorder %s12, 0
      %p55 = por %p53, %p54
      %p56 = scmp.ne.s32.totalorder %s45, %s48
      %p57 = scmp.eq.s32.totalorder %s17, 3
      %p58 = por %p56, %p57
      %p59 = scmp.ne.s32.totalorder %s48, %s49
      %p60 = scmp.eq.s32.totalorder %s17, 0
      %p61 = por %p59, %p60
      %p62 = scmp.ne.s32.totalorder %s48, %s49
      %p63 = scmp.eq.s32.totalorder %s18, 3
      %p64 = por %p62, %p63
      %p66 = scmp.ne.s32.totalorder %s49, %s65
      %p67 = scmp.eq.s32.totalorder %s18, 0
      %p68 = por %p66, %p67
      %s69 = sadd.s32 %s20, %s21
      %s70 = sadd.s32 %s34, %s30
      %s71 = ssub.s32 %s19, %s38
      %s72 = ssub.s32 %s69, %s70
      %s73 = sor.u32 %s71, %s72
      %p74 = scmp.eq.s32.totalorder %s73, 0
      %s76 = sadd.s32 %s75, 1
      %s77 = scalar_select %p74, %s75, %s76
      %p80 = pneg %p74
      %p81 = scmp.eq.s32.totalorder %s12, 3
      %p82 = por %p80, %p81
      %p83 = scmp.ne.s32.totalorder %s75, %s78
      %p84 = scmp.eq.s32.totalorder %s12, 0
      %p85 = por %p83, %p84
      %p86 = scmp.ne.s32.totalorder %s75, %s78
      %p87 = scmp.eq.s32.totalorder %s17, 3
      %p88 = por %p86, %p87
      %p89 = scmp.ne.s32.totalorder %s78, %s79
      %p90 = scmp.eq.s32.totalorder %s17, 0
      %p91 = por %p89, %p90
      %p92 = scmp.ne.s32.totalorder %s78, %s79
      %p93 = scmp.eq.s32.totalorder %s18, 3
      %p94 = por %p92, %p93
      %p96 = scmp.ne.s32.totalorder %s79, %s95
      %p97 = scmp.eq.s32.totalorder %s18, 0
      %p98 = por %p96, %p97
      %s100 = sadd.s32 %s99, 1
      %p103 = scmp.eq.s32.totalorder %s12, 3
      %p104 = scmp.ne.s32.totalorder %s99, %s101
      %p105 = scmp.eq.s32.totalorder %s12, 0
      %p106 = por %p104, %p105
      %p107 = scmp.ne.s32.totalorder %s99, %s101
      %p108 = scmp.eq.s32.totalorder %s17, 3
      %p109 = por %p107, %p108
      %p110 = scmp.ne.s32.totalorder %s101, %s102
      %p111 = scmp.eq.s32.totalorder %s17, 0
      %p112 = por %p110, %p111
      %p113 = scmp.ne.s32.totalorder %s101, %s102
      %p114 = scmp.eq.s32.totalorder %s18, 3
      %p115 = por %p113, %p114
      %p117 = scmp.ne.s32.totalorder %s102, %s116
      %p118 = scmp.eq.s32.totalorder %s18, 0
      %p119 = por %p117, %p118
      %s121 = sadd.s32 %s120, 1
      %p124 = scmp.eq.s32.totalorder %s12, 3
      %p125 = scmp.ne.s32.totalorder %s120, %s122
      %p126 = scmp.eq.s32.totalorder %s12, 0
      %p127 = por %p125, %p126
      %p128 = scmp.ne.s32.totalorder %s120, %s122
      %p129 = scmp.eq.s32.totalorder %s17, 3
      %p130 = por %p128, %p129
      %p131 = scmp.ne.s32.totalorder %s122, %s123
      %p132 = scmp.eq.s32.totalorder %s17, 0
      %p133 = por %p131, %p132
      %p134 = scmp.ne.s32.totalorder %s122, %s123
      %p135 = scmp.eq.s32.totalorder %s18, 3
      %p136 = por %p134, %p135
      %p138 = scmp.ne.s32.totalorder %s123, %s137
      %p139 = scmp.eq.s32.totalorder %s18, 0
      %p140 = por %p138, %p139
      %s141 = ssub.s32 %s19, %s38
      %s142 = ssub.s32 %s20, %s34
      %s143 = sor.u32 %s141, %s142
      %p144 = scmp.eq.s32.totalorder %s143, 0
      %s146 = sadd.s32 %s145, 1
      %s147 = scalar_select %p144, %s145, %s146
      %p150 = pneg %p144
      %p151 = scmp.eq.s32.totalorder %s12, 3
      %p152 = por %p150, %p151
      %p153 = scmp.ne.s32.totalorder %s145, %s148
      %p154 = scmp.eq.s32.totalorder %s12, 0
      %p155 = por %p153, %p154
      %p156 = scmp.ne.s32.totalorder %s145, %s148
      %p157 = scmp.eq.s32.totalorder %s17, 3
      %p158 = por %p156, %p157
      %p159 = scmp.ne.s32.totalorder %s148, %s149
      %p160 = scmp.eq.s32.totalorder %s17, 0
      %p161 = por %p159, %p160
      %p162 = scmp.ne.s32.totalorder %s148, %s149
      %p163 = scmp.eq.s32.totalorder %s18, 3
      %p164 = por %p162, %p163
      %p166 = scmp.ne.s32.totalorder %s149, %s165
      %p167 = scmp.eq.s32.totalorder %s18, 0
      %p168 = por %p166, %p167
      %s169 = ssub.s32 %s19, %s38
      %s170 = ssub.s32 %s20, %s34
      %s171 = sor.u32 %s169, %s170
      %p172 = scmp.eq.s32.totalorder %s171, 0
      %s174 = sadd.s32 %s173, 1
      %s175 = scalar_select %p172, %s173, %s174
      %p178 = pneg %p172
      %p179 = scmp.eq.s32.totalorder %s12, 3
      %p180 = por %p178, %p179
      %p181 = scmp.ne.s32.totalorder %s173, %s176
      %p182 = scmp.eq.s32.totalorder %s12, 0
      %p183 = por %p181, %p182
      %p184 = scmp.ne.s32.totalorder %s173, %s176
      %p185 = scmp.eq.s32.totalorder %s17, 3
      %p186 = por %p184, %p185
      %p187 = scmp.ne.s32.totalorder %s176, %s177
      %p188 = scmp.eq.s32.totalorder %s17, 0
      %p189 = por %p187, %p188
      %p190 = scmp.ne.s32.totalorder %s176, %s177
      %p191 = scmp.eq.s32.totalorder %s18, 3
      %p192 = por %p190, %p191
      %p194 = scmp.ne.s32.totalorder %s177, %s193
      %p195 = scmp.eq.s32.totalorder %s18, 0
      %p196 = por %p194, %p195
      %p197 = scmp.le.s32.totalorder 1, %s12
      %p198 = scmp.lt.s32.totalorder %s12, 5
      %p199 = pnand %p197, %p198
      %p200 = pneg %p199
      // Predicated region
      $region9: #{mglnet_forward.2} parent=5 // pred_check
        _
      $region10: #{mglnet_forward.2} parent=5 // pred_check_branch
        %202 = sbr.rel (%p199) target = $region12
      $region11: #{mglnet_forward.2} parent=5 // pred_region
        %s203 = ssub.s32 %s12, 1
        // Predicated region
        $region13: #{mglnet_forward.2} parent=11 // pred_check
          %p204 = pneg %p112
        $region14: #{mglnet_forward.2} parent=11 // pred_check_branch
          %206 = sbr.rel (%p204) target = $region16
        $region15: #{mglnet_forward.2} parent=11 // pred_region
          _
        $region16: #{mglnet_forward.2} parent=11 // pred_fallthru
          _
        // Predicated region
        $region17: #{mglnet_forward.2} parent=11 // pred_check
          %p207 = pneg %p133
        $region18: #{mglnet_forward.2} parent=11 // pred_check_branch
          %209 = sbr.rel (%p207) target = $region20
        $region19: #{mglnet_forward.2} parent=11 // pred_region
          _
        $region20: #{mglnet_forward.2} parent=11 // pred_fallthru
          _
      $region12: #{mglnet_forward.2} parent=5 // pred_fallthru
        _
      %p210 = scmp.lt.s32.totalorder %s12, 4
      // Predicated region
      $region21: #{mglnet_forward.2} parent=5 // pred_check
        %p211 = pneg %p210
      $region22: #{mglnet_forward.2} parent=5 // pred_check_branch
        %213 = sbr.rel (%p211) target = $region24
      $region23: #{mglnet_forward.2} parent=5 // pred_region
        // Predicated region
        $region25: #{mglnet_forward.2} parent=23 // pred_check
          %p214 = pneg %p55
        $region26: #{mglnet_forward.2} parent=23 // pred_check_branch
          %216 = sbr.rel (%p214) target = $region28
        $region27: #{mglnet_forward.2} parent=23 // pred_region
          %s217 = sand.u32 %s45, 1
          %s218 = sand.u32 %s45, 1
          %s219 = smul.addr %s218, 32
          %s220 = scalar_lea.vmem [#allocation2], %s219
          %s221 = sadd.s32 %s20, %s21
          %s222 = smul.addr %s19, 8
          %s223 = sadd.s32 %s221, %s222
          %s224 = smul.addr %s223, 8
          %s225 = scalar_lea.vmem %s0, %s224
          // Predicated region
          $region29: #{mglnet_forward.2} parent=27 // pred_check
            _
          $region30: #{mglnet_forward.2} parent=27 // pred_check_branch
            %227 = sbr.rel (0) target = $region32
          $region31: #{mglnet_forward.2} parent=27 // pred_region
            // Predicated region
            $region33: #{mglnet_forward.2} parent=31 // pred_check
              _
            $region34: #{mglnet_forward.2} parent=31 // pred_check_branch
              %229 = sbr.rel (0) target = $region36
            $region35: #{mglnet_forward.2} parent=31 // pred_region
              // Predicated region
              $region48: #{mglnet_forward.2} parent=35 // pred_check
                _
              $region49: #{mglnet_forward.2} parent=35 // pred_check_branch
                %251 = sbr.rel (0) target = $region51
              $region50: #{mglnet_forward.2} parent=35 // pred_region
                loop: start=0, step=1, limit=1
                $region52: #{mglnet_forward.2} parent=50 // loop_pre_header
                  _
                $region53: #{mglnet_forward.2} parent=50 // loop_header
                  %s253 = sphi 0, %s257
                  %p254 = scmp.ge.s32.totalorder %s253, 1
                  %s258 = sphi %s225, %s225
                  %s259 = sphi %s220, %s220
                $region54: #{mglnet_forward.2} parent=50 // loop_header_branch
                  %256 = sbr.rel (%p254) target = $region58
                $region55: #{mglnet_forward.2} parent=50 // loop_body
                  %v260 = vld [vmem:[%s258] sm:$0xff]
                  %261 = vst [vmem:[%s259] sm:$0xff] %v260
                  %v262 = vld [vmem:[%s258 + $0x10] sm:$0xff]
                  %263 = vst [vmem:[%s259 + $0x8] sm:$0xff] %v262
                  %v264 = vld [vmem:[%s258 + $0x20] sm:$0xff]
                  %265 = vst [vmem:[%s259 + $0x10] sm:$0xff] %v264
                  %v266 = vld [vmem:[%s258 + $0x30] sm:$0xff]
                  %267 = vst [vmem:[%s259 + $0x18] sm:$0xff] %v266
                $region56: #{mglnet_forward.2} parent=50 // loop_footer
                  %s257 = sadd.s32 1, %s253
                $region57: #{mglnet_forward.2} parent=50 // loop_footer_branch
                  %252 = sbr.rel target = $region53
                $region58: #{mglnet_forward.2} parent=50 // loop_exit
                  _
              $region51: #{mglnet_forward.2} parent=35 // pred_fallthru
                _
              // Predicated region
              $region59: #{mglnet_forward.2} parent=35 // pred_check
                _
              $region60: #{mglnet_forward.2} parent=35 // pred_check_branch
                %269 = sbr.rel target = $region62
              $region61: #{mglnet_forward.2} parent=35 // pred_region
                _
              $region62: #{mglnet_forward.2} parent=35 // pred_fallthru
                _
            $region36: #{mglnet_forward.2} parent=31 // pred_fallthru
              _
            // Predicated region
            $region37: #{mglnet_forward.2} parent=31 // pred_check
              _
            $region38: #{mglnet_forward.2} parent=31 // pred_check_branch
              %231 = sbr.rel target = $region40
            $region39: #{mglnet_forward.2} parent=31 // pred_region
              %s233 = ssub.s32 256, 1
              loop: start=0, step=1, limit=1
              $region41: #{mglnet_forward.2} parent=39 // loop_pre_header
                _
              $region42: #{mglnet_forward.2} parent=39 // loop_header
                %s235 = sphi 0, %s239
                %p236 = scmp.ge.s32.totalorder %s235, 1
                %s240 = sphi %s225, %s225
                %s241 = sphi %s220, %s220
              $region43: #{mglnet_forward.2} parent=39 // loop_header_branch
                %238 = sbr.rel (%p236) target = $region47
              $region44: #{mglnet_forward.2} parent=39 // loop_body
                %v242 = vld [vmem:[%s240] sm:%s233]
                %243 = vst [vmem:[%s241] sm:%s233] %v242
                %v244 = vld [vmem:[%s240 + $0x10] sm:%s233]
                %245 = vst [vmem:[%s241 + $0x8] sm:%s233] %v244
                %v246 = vld [vmem:[%s240 + $0x20] sm:%s233]
                %247 = vst [vmem:[%s241 + $0x10] sm:%s233] %v246
                %v248 = vld [vmem:[%s240 + $0x30] sm:%s233]
                %249 = vst [vmem:[%s241 + $0x18] sm:%s233] %v248
              $region45: #{mglnet_forward.2} parent=39 // loop_footer
                %s239 = sadd.s32 1, %s235
              $region46: #{mglnet_forward.2} parent=39 // loop_footer_branch
                %234 = sbr.rel target = $region42
              $region47: #{mglnet_forward.2} parent=39 // loop_exit
                _
            $region40: #{mglnet_forward.2} parent=31 // pred_fallthru
              _
          $region32: #{mglnet_forward.2} parent=27 // pred_fallthru
            _
          %270 = vnop
        $region28: #{mglnet_forward.2} parent=23 // pred_fallthru
          _
        // Predicated region
        $region63: #{mglnet_forward.2} parent=23 // pred_check
          %p271 = pneg %p85
        $region64: #{mglnet_forward.2} parent=23 // pred_check_branch
          %273 = sbr.rel (%p271) target = $region66
        $region65: #{mglnet_forward.2} parent=23 // pred_region
          %s274 = sand.u32 %s75, 1
          %s275 = sand.u32 %s75, 1
          %s276 = smul.addr %s275, 32
          %s277 = scalar_lea.vmem [#allocation3], %s276
          %s278 = sadd.s32 %s20, %s21
          %s279 = smul.addr %s19, 8
          %s280 = sadd.s32 %s278, %s279
          %s281 = smul.addr %s280, 8
          %s282 = scalar_lea.vmem %s1, %s281
          // Predicated region
          $region67: #{mglnet_forward.2} parent=65 // pred_check
            _
          $region68: #{mglnet_forward.2} parent=65 // pred_check_branch
            %284 = sbr.rel (0) target = $region70
          $region69: #{mglnet_forward.2} parent=65 // pred_region
            // Predicated region
            $region71: #{mglnet_forward.2} parent=69 // pred_check
              _
            $region72: #{mglnet_forward.2} parent=69 // pred_check_branch
              %286 = sbr.rel (0) target = $region74
            $region73: #{mglnet_forward.2} parent=69 // pred_region
              // Predicated region
              $region86: #{mglnet_forward.2} parent=73 // pred_check
                _
              $region87: #{mglnet_forward.2} parent=73 // pred_check_branch
                %308 = sbr.rel (0) target = $region89
              $region88: #{mglnet_forward.2} parent=73 // pred_region
                loop: start=0, step=1, limit=1
                $region90: #{mglnet_forward.2} parent=88 // loop_pre_header
                  _
                $region91: #{mglnet_forward.2} parent=88 // loop_header
                  %s310 = sphi 0, %s314
                  %p311 = scmp.ge.s32.totalorder %s310, 1
                  %s315 = sphi %s282, %s282
                  %s316 = sphi %s277, %s277
                $region92: #{mglnet_forward.2} parent=88 // loop_header_branch
                  %313 = sbr.rel (%p311) target = $region96
                $region93: #{mglnet_forward.2} parent=88 // loop_body
                  %v317 = vld [vmem:[%s315] sm:$0xff]
                  %318 = vst [vmem:[%s316] sm:$0xff] %v317
                  %v319 = vld [vmem:[%s315 + $0x10] sm:$0xff]
                  %320 = vst [vmem:[%s316 + $0x8] sm:$0xff] %v319
                  %v321 = vld [vmem:[%s315 + $0x20] sm:$0xff]
                  %322 = vst [vmem:[%s316 + $0x10] sm:$0xff] %v321
                  %v323 = vld [vmem:[%s315 + $0x30] sm:$0xff]
                  %324 = vst [vmem:[%s316 + $0x18] sm:$0xff] %v323
                $region94: #{mglnet_forward.2} parent=88 // loop_footer
                  %s314 = sadd.s32 1, %s310
                $region95: #{mglnet_forward.2} parent=88 // loop_footer_branch
                  %309 = sbr.rel target = $region91
                $region96: #{mglnet_forward.2} parent=88 // loop_exit
                  _
              $region89: #{mglnet_forward.2} parent=73 // pred_fallthru
                _
              // Predicated region
              $region97: #{mglnet_forward.2} parent=73 // pred_check
                _
              $region98: #{mglnet_forward.2} parent=73 // pred_check_branch
                %326 = sbr.rel target = $region100
              $region99: #{mglnet_forward.2} parent=73 // pred_region
                _
              $region100: #{mglnet_forward.2} parent=73 // pred_fallthru
                _
            $region74: #{mglnet_forward.2} parent=69 // pred_fallthru
              _
            // Predicated region
            $region75: #{mglnet_forward.2} parent=69 // pred_check
              _
            $region76: #{mglnet_forward.2} parent=69 // pred_check_branch
              %288 = sbr.rel target = $region78
            $region77: #{mglnet_forward.2} parent=69 // pred_region
              %s290 = ssub.s32 256, 1
              loop: start=0, step=1, limit=1
              $region79: #{mglnet_forward.2} parent=77 // loop_pre_header
                _
              $region80: #{mglnet_forward.2} parent=77 // loop_header
                %s292 = sphi 0, %s296
                %p293 = scmp.ge.s32.totalorder %s292, 1
                %s297 = sphi %s282, %s282
                %s298 = sphi %s277, %s277
              $region81: #{mglnet_forward.2} parent=77 // loop_header_branch
                %295 = sbr.rel (%p293) target = $region85
              $region82: #{mglnet_forward.2} parent=77 // loop_body
                %v299 = vld [vmem:[%s297] sm:%s290]
                %300 = vst [vmem:[%s298] sm:%s290] %v299
                %v301 = vld [vmem:[%s297 + $0x10] sm:%s290]
                %302 = vst [vmem:[%s298 + $0x8] sm:%s290] %v301
                %v303 = vld [vmem:[%s297 + $0x20] sm:%s290]
                %304 = vst [vmem:[%s298 + $0x10] sm:%s290] %v303
                %v305 = vld [vmem:[%s297 + $0x30] sm:%s290]
                %306 = vst [vmem:[%s298 + $0x18] sm:%s290] %v305
              $region83: #{mglnet_forward.2} parent=77 // loop_footer
                %s296 = sadd.s32 1, %s292
              $region84: #{mglnet_forward.2} parent=77 // loop_footer_branch
                %291 = sbr.rel target = $region80
              $region85: #{mglnet_forward.2} parent=77 // loop_exit
                _
            $region78: #{mglnet_forward.2} parent=69 // pred_fallthru
              _
          $region70: #{mglnet_forward.2} parent=65 // pred_fallthru
            _
          %327 = vnop
        $region66: #{mglnet_forward.2} parent=23 // pred_fallthru
          _
      $region24: #{mglnet_forward.2} parent=5 // pred_fallthru
        _
      %p328 = scmp.le.s32.totalorder 1, %s12
      %p329 = scmp.lt.s32.totalorder %s12, 5
      %p330 = pnand %p328, %p329
      %p331 = pneg %p330
      // Predicated region
      $region101: #{mglnet_forward.2} parent=5 // pred_check
        _
      $region102: #{mglnet_forward.2} parent=5 // pred_check_branch
        %333 = sbr.rel (%p330) target = $region104
      $region103: #{mglnet_forward.2} parent=5 // pred_region
        %s334 = ssub.s32 %s12, 1
        %s335 = sand.u32 %s48, 1
        %s336 = sand.u32 %s48, 1
        %s337 = smul.addr %s336, 32
        %s338 = scalar_lea.vmem [#allocation2], %s337
        // Predicated region
        $region105: #{mglnet_forward.2} parent=103 // pred_check
          %p339 = pneg %p61
        $region106: #{mglnet_forward.2} parent=103 // pred_check_branch
          %341 = sbr.rel (%p339) target = $region108
        $region107: #{mglnet_forward.2} parent=103 // pred_region
          _
        $region108: #{mglnet_forward.2} parent=103 // pred_fallthru
          _
        %s342 = sand.u32 %s78, 1
        %s343 = sand.u32 %s78, 1
        %s344 = smul.addr %s343, 32
        %s345 = scalar_lea.vmem [#allocation3], %s344
        // Predicated region
        $region109: #{mglnet_forward.2} parent=103 // pred_check
          %p346 = pneg %p91
        $region110: #{mglnet_forward.2} parent=103 // pred_check_branch
          %348 = sbr.rel (%p346) target = $region112
        $region111: #{mglnet_forward.2} parent=103 // pred_region
          _
        $region112: #{mglnet_forward.2} parent=103 // pred_fallthru
          _
        %s349 = sand.u32 %s48, 1
        %s350 = sand.u32 %s48, 1
        %s351 = smul.addr %s350, 32
        %s352 = scalar_lea.vmem [#allocation2], %s351
        %p353 = pneg %p61
        %p354 = pneg %p58
        %s355 = sand.u32 %s78, 1
        %s356 = sand.u32 %s78, 1
        %s357 = smul.addr %s356, 32
        %s358 = scalar_lea.vmem [#allocation3], %s357
        %p359 = pneg %p91
        %p360 = pneg %p88
        %p361 = pneg %p112
        %p362 = pneg %p109
        %p363 = pneg %p133
        %p364 = pneg %p130
        %p365 = pneg %p161
        %p366 = pneg %p158
        %p367 = scmp.lt.s32.totalorder %s22, 1
        %s368 = scalar_select %p367, %s22, 1
        %p369 = scmp.lt.s32.totalorder %s23, 1
        %s370 = scalar_select %p369, %s23, 1
        %s371 = smul.addr %s370, 8
        %s372 = smul.addr %s368, 16
        %s373 = sadd.s32 %s371, %s372
        %s374 = smul.addr %s373, 8
        %s375 = scalar_lea.vmem %s4, %s374
        %p376 = pneg %p189
        %p377 = pneg %p186
        %p378 = scmp.lt.s32.totalorder %s22, 1
        %s379 = scalar_select %p378, %s22, 1
        %p380 = scmp.lt.s32.totalorder %s23, 1
        %s381 = scalar_select %p380, %s23, 1
        %s382 = smul.addr %s381, 8
        %s383 = smul.addr %s379, 16
        %s384 = sadd.s32 %s382, %s383
        %s385 = smul.addr %s384, 8
        %s386 = scalar_lea.vmem %s5, %s385
        %s387 = sadd.s32 %s23, %s24
        %s388 = sadd.s32 %s23, %s24
        %p389 = scmp.lt.s32.totalorder %s22, 1
        %s390 = scalar_select %p389, %s22, 1
        %p391 = scmp.lt.s32.totalorder %s23, 1
        %s392 = scalar_select %p391, %s23, 1
        %s393 = smul.addr %s392, 8
        %s394 = smul.addr %s390, 16
        %s395 = sadd.s32 %s393, %s394
        %s396 = smul.addr %s395, 8
        %s397 = scalar_lea.vmem %s4, %s396
        %p398 = scmp.lt.s32.totalorder %s22, 1
        %s399 = scalar_select %p398, %s22, 1
        %p400 = scmp.lt.s32.totalorder %s23, 1
        %s401 = scalar_select %p400, %s23, 1
        %s402 = smul.addr %s401, 8
        %s403 = smul.addr %s399, 16
        %s404 = sadd.s32 %s402, %s403
        %s405 = smul.addr %s404, 8
        %s406 = scalar_lea.vmem %s5, %s405
        %p407 = scmp.eq.s32.totalorder %s24, 0
        // Predicated region
        $region113: #{mglnet_forward.2} parent=103 // pred_check
          %p408 = pneg %p407
        $region114: #{mglnet_forward.2} parent=103 // pred_check_branch
          %410 = sbr.rel (%p408) target = $region116
        $region115: #{mglnet_forward.2} parent=103 // pred_region
          %vm411 = vcmask 523264
          %412 = vst.msk [vmem:[%s397] sm:$0xff] %vm411, 0.0
          %413 = vst.msk [vmem:[%s397 + $0x8] sm:$0xff] %vm411, 0.0
          %414 = vst.msk [vmem:[%s397 + $0x10] sm:$0xff] %vm411, 0.0
          %415 = vst.msk [vmem:[%s397 + $0x18] sm:$0xff] %vm411, 0.0
          %416 = vst.msk [vmem:[%s397 + $0x20] sm:$0xff] %vm411, 0.0
          %417 = vst.msk [vmem:[%s397 + $0x28] sm:$0xff] %vm411, 0.0
          %418 = vst.msk [vmem:[%s397 + $0x30] sm:$0xff] %vm411, 0.0
          %419 = vst.msk [vmem:[%s397 + $0x38] sm:$0xff] %vm411, 0.0
          %vm420 = vcmask 7168
          %421 = vst.msk [vmem:[%s406] sm:$0xff] %vm420, 0.0
          %422 = vst.msk [vmem:[%s406 + $0x8] sm:$0xff] %vm420, 0.0
          %423 = vst.msk [vmem:[%s406 + $0x10] sm:$0xff] %vm420, 0.0
          %424 = vst.msk [vmem:[%s406 + $0x18] sm:$0xff] %vm420, 0.0
          %425 = vst.msk [vmem:[%s406 + $0x20] sm:$0xff] %vm420, 0.0
          %426 = vst.msk [vmem:[%s406 + $0x28] sm:$0xff] %vm420, 0.0
          %427 = vst.msk [vmem:[%s406 + $0x30] sm:$0xff] %vm420, 0.0
          %428 = vst.msk [vmem:[%s406 + $0x38] sm:$0xff] %vm420, 0.0
        $region116: #{mglnet_forward.2} parent=103 // pred_fallthru
          _
        %v429 = vld [vmem:[%s338] sm:$0xff]
        %v430 = vld [vmem:[%s338 + $0x8] sm:$0xff]
        %v431 = vld [vmem:[%s338 + $0x10] sm:$0xff]
        %v432 = vld [vmem:[%s338 + $0x18] sm:$0xff]
        %v433 = vld [vmem:[%s345] sm:$0xff]
        %v434 = vld [vmem:[%s345 + $0x8] sm:$0xff]
        %v435 = vld [vmem:[%s345 + $0x10] sm:$0xff]
        %v436 = vld [vmem:[%s345 + $0x18] sm:$0xff]
        %v437 = vld [vmem:[%s2] sm:$0xff]
        %v438 = vld [vmem:[%s2 + $0x8] sm:$0xff]
        %v439 = vld [vmem:[%s2 + $0x10] sm:$0xff]
        %v440 = vld [vmem:[%s2 + $0x18] sm:$0xff]
        %v441 = vld [vmem:[%s2 + $0x20] sm:$0xff]
        %v442 = vld [vmem:[%s2 + $0x28] sm:$0xff]
        %v443 = vld [vmem:[%s2 + $0x30] sm:$0xff]
        %v444 = vld [vmem:[%s2 + $0x38] sm:$0xff]
        %v445 = vld [vmem:[%s3] sm:$0xff]
        %v446 = vld [vmem:[%s3 + $0x8] sm:$0xff]
        %v447 = vld [vmem:[%s3 + $0x10] sm:$0xff]
        %v448 = vld [vmem:[%s3 + $0x18] sm:$0xff]
        %v449 = vld [vmem:[%s3 + $0x20] sm:$0xff]
        %v450 = vld [vmem:[%s3 + $0x28] sm:$0xff]
        %v451 = vld [vmem:[%s3 + $0x30] sm:$0xff]
        %v452 = vld [vmem:[%s3 + $0x38] sm:$0xff]
        %454 = vset.pattern.permute.xlu0 0
        %455 = vperm.xlu0 %454, %v445
        %v456 = vpop.permute.xlu0 %455
        %459 = vset.pattern.permute.xlu0 0
        %460 = vperm.xlu0 %459, %v446
        %v461 = vpop.permute.xlu0 %460
        %464 = vset.pattern.permute.xlu0 0
        %465 = vperm.xlu0 %464, %v447
        %v466 = vpop.permute.xlu0 %465
        %469 = vset.pattern.permute.xlu0 0
        %470 = vperm.xlu0 %469, %v448
        %v471 = vpop.permute.xlu0 %470
        %474 = vset.pattern.permute.xlu0 0
        %475 = vperm.xlu0 %474, %v449
        %v476 = vpop.permute.xlu0 %475
        %479 = vset.pattern.permute.xlu0 0
        %480 = vperm.xlu0 %479, %v450
        %v481 = vpop.permute.xlu0 %480
        %484 = vset.pattern.permute.xlu0 0
        %485 = vperm.xlu0 %484, %v451
        %v486 = vpop.permute.xlu0 %485
        %489 = vset.pattern.permute.xlu0 0
        %490 = vperm.xlu0 %489, %v452
        %v491 = vpop.permute.xlu0 %490
        %vm493 = vcmask 523264
        %v495 = vsel %vm493, %v437, 0
        %v498 = vsel %vm493, %v438, 0
        %v501 = vsel %vm493, %v439, 0
        %v504 = vsel %vm493, %v440, 0
        %v507 = vsel %vm493, %v441, 0
        %v510 = vsel %vm493, %v442, 0
        %v513 = vsel %vm493, %v443, 0
        %v516 = vsel %vm493, %v444, 0
        %518 = vmatprep.subr.mxu0 0.0
        %519 = vmatpush1.msra.mxu0 0.0
        %520 = vmatprep.subr.mxu0 0.0
        %521 = vmatpush1.msra.mxu0 0.0
        %522 = vmatprep.subr.mxu0 0.0
        %523 = vmatpush1.msra.mxu0 0.0
        %524 = vmatprep.subr.mxu0 0.0
        %525 = vmatpush1.msra.mxu0 0.0
        %526 = vmatprep.subr.mxu0 0.0
        %527 = vmatpush1.msra.mxu0 0.0
        %528 = vmatprep.subr.mxu0 0.0
        %529 = vmatpush1.msra.mxu0 0.0
        %530 = vmatprep.subr.mxu0 0.0
        %531 = vmatpush1.msra.mxu0 0.0
        %532 = vmatprep.subr.mxu0 0.0
        %533 = vmatpush1.msra.mxu0 0.0
        %534 = vmatprep.subr.mxu0 0.0
        %535 = vmatpush1.msra.mxu0 %v436
        %536 = vmatprep.subr.mxu0 0.0
        %537 = vmatpush1.msra.mxu0 %v435
        %538 = vmatprep.subr.mxu0 0.0
        %539 = vmatpush1.msra.mxu0 %v434
        %540 = vmatprep.subr.mxu0 0.0
        %541 = vmatpush1.msra.mxu0 %v433
        %542 = vmatprep.subr.mxu0 0.0
        %543 = vmatpush1.msra.mxu0 %v432
        %544 = vmatprep.subr.mxu0 0.0
        %545 = vmatpush1.msra.mxu0 %v431
        %546 = vmatprep.subr.mxu0 0.0
        %547 = vmatpush1.msra.mxu0 %v430
        %548 = vmatprep.subr.mxu0 0.0
        %549 = vmatpush1.msra.mxu0 %v429
        %550 = vmatprep.subr.mxu0 0.0
        %551 = vmatpush2.msra.mxu0 0.0
        %552 = vmatprep.subr.mxu0 0.0
        %553 = vmatpush2.msra.mxu0 0.0
        %554 = vmatprep.subr.mxu0 0.0
        %555 = vmatpush2.msra.mxu0 0.0
        %556 = vmatprep.subr.mxu0 0.0
        %557 = vmatpush2.msra.mxu0 0.0
        %558 = vmatprep.subr.mxu0 0.0
        %559 = vmatpush2.msra.mxu0 0.0
        %560 = vmatprep.subr.mxu0 0.0
        %561 = vmatpush2.msra.mxu0 0.0
        %562 = vmatprep.subr.mxu0 0.0
        %563 = vmatpush2.msra.mxu0 0.0
        %564 = vmatprep.subr.mxu0 0.0
        %565 = vmatpush2.msra.mxu0 0.0
        %566 = vmatprep.subr.mxu0 0.0
        %567 = vmatpush2.msra.mxu0 0.0
        %568 = vmatprep.subr.mxu0 0.0
        %569 = vmatpush2.msra.mxu0 0.0
        %570 = vmatprep.subr.mxu0 0.0
        %571 = vmatpush2.msra.mxu0 0.0
        %572 = vmatprep.subr.mxu0 0.0
        %573 = vmatpush2.msra.mxu0 0.0
        %574 = vmatprep.subr.mxu0 0.0
        %575 = vmatpush2.msra.mxu0 0.0
        %576 = vmatprep.subr.mxu0 0.0
        %577 = vmatpush2.msra.mxu0 0.0
        %578 = vmatprep.subr.mxu0 0.0
        %579 = vmatpush2.msra.mxu0 0.0
        %580 = vmatprep.subr.mxu0 0.0
        %581 = vmatpush2.msra.mxu0 0.0
        %582 = vmatprep.mubr.f32.mxu0 0.0
        %583 = vmatmul.mubr.f32.gmra.mxu0 %v495
        %v584 = vpop.f32.mrf.mxu0
        %v585 = vadd.f32 %v456, %v584
        %v586 = vpop.f32.mrf.mxu0
        %587 = vmatprep.mubr.f32.mxu0 0.0
        %588 = vmatmul.mubr.f32.gmra.mxu0 %v498
        %v589 = vpop.f32.mrf.mxu0
        %v590 = vadd.f32 %v461, %v589
        %v591 = vpop.f32.mrf.mxu0
        %592 = vmatprep.mubr.f32.mxu0 0.0
        %593 = vmatmul.mubr.f32.gmra.mxu0 %v501
        %v594 = vpop.f32.mrf.mxu0
        %v595 = vadd.f32 %v466, %v594
        %v596 = vpop.f32.mrf.mxu0
        %597 = vmatprep.mubr.f32.mxu0 0.0
        %598 = vmatmul.mubr.f32.gmra.mxu0 %v504
        %v599 = vpop.f32.mrf.mxu0
        %v600 = vadd.f32 %v471, %v599
        %v601 = vpop.f32.mrf.mxu0
        %602 = vmatprep.mubr.f32.mxu0 0.0
        %603 = vmatmul.mubr.f32.gmra.mxu0 %v507
        %v604 = vpop.f32.mrf.mxu0
        %v605 = vadd.f32 %v476, %v604
        %v606 = vpop.f32.mrf.mxu0
        %607 = vmatprep.mubr.f32.mxu0 0.0
        %608 = vmatmul.mubr.f32.gmra.mxu0 %v510
        %v609 = vpop.f32.mrf.mxu0
        %v610 = vadd.f32 %v481, %v609
        %v611 = vpop.f32.mrf.mxu0
        %612 = vmatprep.mubr.f32.mxu0 0.0
        %613 = vmatmul.mubr.f32.gmra.mxu0 %v513
        %v614 = vpop.f32.mrf.mxu0
        %v615 = vadd.f32 %v486, %v614
        %v616 = vpop.f32.mrf.mxu0
        %617 = vmatprep.mubr.f32.mxu0 0.0
        %618 = vmatmul.mubr.f32.gmra.mxu0 %v516
        %v619 = vpop.f32.mrf.mxu0
        %v620 = vadd.f32 %v491, %v619
        %v621 = vpop.f32.mrf.mxu0
        %622 = vdwg.mxu0
        %v623 = vmax.f32 %v585, %v590
        %v624 = vmax.f32 %v595, %v600
        %v625 = vmax.f32 %v623, %v624
        %v626 = vrot.slane %v625, 4
        %v627 = vmax.f32 %v625, %v626
        %v628 = vrot.slane %v627, 2
        %v629 = vmax.f32 %v627, %v628
        %v630 = vrot.slane %v629, 1
        %v631 = vmax.f32 %v629, %v630
        %v632 = vsub.f32 %v585, %v631
        %v633 = vsub.f32 %v590, %v631
        %v634 = vsub.f32 %v595, %v631
        %v635 = vsub.f32 %v600, %v631
        %v636 = vmul.f32 %v632, 1.442695
        %v637 = vpow.pop %v636
        %v638 = vmul.f32 %v633, 1.442695
        %v639 = vpow.pop %v638
        %v640 = vmul.f32 %v634, 1.442695
        %v641 = vpow.pop %v640
        %v642 = vmul.f32 %v635, 1.442695
        %v643 = vpow.pop %v642
        %v644 = vadd.f32 %v637, %v639
        %v645 = vadd.f32 %v644, %v641
        %v646 = vadd.f32 %v645, %v643
        %v647 = vrot.slane %v646, 4
        %v648 = vadd.f32 %v646, %v647
        %v649 = vrot.slane %v648, 2
        %v650 = vadd.f32 %v648, %v649
        %v651 = vrot.slane %v650, 1
        %v652 = vadd.f32 %v650, %v651
        %v653 = vrcp.pop %v652
        %v654 = vmul.f32 %v637, %v653
        %v655 = vmul.f32 %v639, %v653
        %v656 = vmul.f32 %v641, %v653
        %v657 = vmul.f32 %v643, %v653
        %v658 = vmax.f32 %v605, %v610
        %v659 = vmax.f32 %v615, %v620
        %v660 = vmax.f32 %v658, %v659
        %v661 = vrot.slane %v660, 4
        %v662 = vmax.f32 %v660, %v661
        %v663 = vrot.slane %v662, 2
        %v664 = vmax.f32 %v662, %v663
        %v665 = vrot.slane %v664, 1
        %v666 = vmax.f32 %v664, %v665
        %v667 = vsub.f32 %v605, %v666
        %v668 = vsub.f32 %v610, %v666
        %v669 = vsub.f32 %v615, %v666
        %v670 = vsub.f32 %v620, %v666
        %v671 = vmul.f32 %v667, 1.442695
        %v672 = vpow.pop %v671
        %v673 = vmul.f32 %v668, 1.442695
        %v674 = vpow.pop %v673
        %v675 = vmul.f32 %v669, 1.442695
        %v676 = vpow.pop %v675
        %v677 = vmul.f32 %v670, 1.442695
        %v678 = vpow.pop %v677
        %v679 = vadd.f32 %v672, %v674
        %v680 = vadd.f32 %v679, %v676
        %v681 = vadd.f32 %v680, %v678
        %v682 = vrot.slane %v681, 4
        %v683 = vadd.f32 %v681, %v682
        %v684 = vrot.slane %v683, 2
        %v685 = vadd.f32 %v683, %v684
        %v686 = vrot.slane %v685, 1
        %v687 = vadd.f32 %v685, %v686
        %v688 = vrcp.pop %v687
        %v689 = vmul.f32 %v672, %v688
        %v690 = vmul.f32 %v674, %v688
        %v691 = vmul.f32 %v676, %v688
        %v692 = vmul.f32 %v678, %v688
        %v693 = vld [vmem:[%s397] sm:$0xff]
        %v694 = vld [vmem:[%s397 + $0x8] sm:$0xff]
        %v695 = vld [vmem:[%s397 + $0x10] sm:$0xff]
        %v696 = vld [vmem:[%s397 + $0x18] sm:$0xff]
        %v697 = vld [vmem:[%s397 + $0x20] sm:$0xff]
        %v698 = vld [vmem:[%s397 + $0x28] sm:$0xff]
        %v699 = vld [vmem:[%s397 + $0x30] sm:$0xff]
        %v700 = vld [vmem:[%s397 + $0x38] sm:$0xff]
        %701 = vmatprep.subr.mxu0 0.0
        %702 = vmatpush1.xpose.msra.mxu0 0.0
        %703 = vmatprep.subr.mxu0 0.0
        %704 = vmatpush1.xpose.msra.mxu0 0.0
        %705 = vmatprep.subr.mxu0 0.0
        %706 = vmatpush1.xpose.msra.mxu0 0.0
        %707 = vmatprep.subr.mxu0 0.0
        %708 = vmatpush1.xpose.msra.mxu0 0.0
        %709 = vmatprep.subr.mxu0 0.0
        %710 = vmatpush1.xpose.msra.mxu0 0.0
        %711 = vmatprep.subr.mxu0 0.0
        %712 = vmatpush1.xpose.msra.mxu0 0.0
        %713 = vmatprep.subr.mxu0 0.0
        %714 = vmatpush1.xpose.msra.mxu0 0.0
        %715 = vmatprep.subr.mxu0 0.0
        %716 = vmatpush1.xpose.msra.mxu0 0.0
        %717 = vmatprep.subr.mxu0 0.0
        %718 = vmatpush1.xpose.msra.mxu0 %v436
        %719 = vmatprep.subr.mxu0 0.0
        %720 = vmatpush1.xpose.msra.mxu0 %v435
        %721 = vmatprep.subr.mxu0 0.0
        %722 = vmatpush1.xpose.msra.mxu0 %v434
        %723 = vmatprep.subr.mxu0 0.0
        %724 = vmatpush1.xpose.msra.mxu0 %v433
        %725 = vmatprep.subr.mxu0 0.0
        %726 = vmatpush1.xpose.msra.mxu0 %v432
        %727 = vmatprep.subr.mxu0 0.0
        %728 = vmatpush1.xpose.msra.mxu0 %v431
        %729 = vmatprep.subr.mxu0 0.0
        %730 = vmatpush1.xpose.msra.mxu0 %v430
        %731 = vmatprep.subr.mxu0 0.0
        %732 = vmatpush1.xpose.msra.mxu0 %v429
        %733 = vmatprep.subr.mxu0 0.0
        %734 = vmatpush2.xpose.msra.mxu0 0.0
        %735 = vmatprep.subr.mxu0 0.0
        %736 = vmatpush2.xpose.msra.mxu0 0.0
        %737 = vmatprep.subr.mxu0 0.0
        %738 = vmatpush2.xpose.msra.mxu0 0.0
        %739 = vmatprep.subr.mxu0 0.0
        %740 = vmatpush2.xpose.msra.mxu0 0.0
        %741 = vmatprep.subr.mxu0 0.0
        %742 = vmatpush2.xpose.msra.mxu0 0.0
        %743 = vmatprep.subr.mxu0 0.0
        %744 = vmatpush2.xpose.msra.mxu0 0.0
        %745 = vmatprep.subr.mxu0 0.0
        %746 = vmatpush2.xpose.msra.mxu0 0.0
        %747 = vmatprep.subr.mxu0 0.0
        %748 = vmatpush2.xpose.msra.mxu0 0.0
        %749 = vmatprep.subr.mxu0 0.0
        %750 = vmatpush2.xpose.msra.mxu0 0.0
        %751 = vmatprep.subr.mxu0 0.0
        %752 = vmatpush2.xpose.msra.mxu0 0.0
        %753 = vmatprep.subr.mxu0 0.0
        %754 = vmatpush2.xpose.msra.mxu0 0.0
        %755 = vmatprep.subr.mxu0 0.0
        %756 = vmatpush2.xpose.msra.mxu0 0.0
        %757 = vmatprep.subr.mxu0 0.0
        %758 = vmatpush2.xpose.msra.mxu0 0.0
        %759 = vmatprep.subr.mxu0 0.0
        %760 = vmatpush2.xpose.msra.mxu0 0.0
        %761 = vmatprep.subr.mxu0 0.0
        %762 = vmatpush2.xpose.msra.mxu0 0.0
        %763 = vmatprep.subr.mxu0 0.0
        %764 = vmatpush2.xpose.msra.mxu0 0.0
        %765 = vmatprep.mubr.f32.mxu0 0.0
        %766 = vmatmul.mubr.f32.gmra.mxu0 %v654
        %v767 = vpop.f32.mrf.mxu0
        %v768 = vadd.f32 0.0, %v767
        %v769 = vpop.f32.mrf.mxu0
        %770 = vmatprep.mubr.f32.mxu0 0.0
        %771 = vmatmul.mubr.f32.gmra.mxu0 %v655
        %v772 = vpop.f32.mrf.mxu0
        %v773 = vadd.f32 0.0, %v772
        %v774 = vpop.f32.mrf.mxu0
        %775 = vmatprep.mubr.f32.mxu0 0.0
        %776 = vmatmul.mubr.f32.gmra.mxu0 %v656
        %v777 = vpop.f32.mrf.mxu0
        %v778 = vadd.f32 0.0, %v777
        %v779 = vpop.f32.mrf.mxu0
        %780 = vmatprep.mubr.f32.mxu0 0.0
        %781 = vmatmul.mubr.f32.gmra.mxu0 %v657
        %v782 = vpop.f32.mrf.mxu0
        %v783 = vadd.f32 0.0, %v782
        %v784 = vpop.f32.mrf.mxu0
        %785 = vmatprep.mubr.f32.mxu0 0.0
        %786 = vmatmul.mubr.f32.gmra.mxu0 %v689
        %v787 = vpop.f32.mrf.mxu0
        %v788 = vadd.f32 0.0, %v787
        %v789 = vpop.f32.mrf.mxu0
        %790 = vmatprep.mubr.f32.mxu0 0.0
        %791 = vmatmul.mubr.f32.gmra.mxu0 %v690
        %v792 = vpop.f32.mrf.mxu0
        %v793 = vadd.f32 0.0, %v792
        %v794 = vpop.f32.mrf.mxu0
        %795 = vmatprep.mubr.f32.mxu0 0.0
        %796 = vmatmul.mubr.f32.gmra.mxu0 %v691
        %v797 = vpop.f32.mrf.mxu0
        %v798 = vadd.f32 0.0, %v797
        %v799 = vpop.f32.mrf.mxu0
        %800 = vmatprep.mubr.f32.mxu0 0.0
        %801 = vmatmul.mubr.f32.gmra.mxu0 %v692
        %v802 = vpop.f32.mrf.mxu0
        %v803 = vadd.f32 0.0, %v802
        %v804 = vpop.f32.mrf.mxu0
        %805 = vdwg.mxu0
        %v806 = vadd.f32 %v693, %v768
        %v807 = vadd.f32 %v694, %v773
        %v808 = vadd.f32 %v695, %v778
        %v809 = vadd.f32 %v696, %v783
        %v810 = vadd.f32 %v697, %v788
        %v811 = vadd.f32 %v698, %v793
        %v812 = vadd.f32 %v699, %v798
        %v813 = vadd.f32 %v700, %v803
        %814 = vst.msk [vmem:[%s397] sm:$0xff] %vm493, %v806
        %815 = vst.msk [vmem:[%s397 + $0x8] sm:$0xff] %vm493, %v807
        %816 = vst.msk [vmem:[%s397 + $0x10] sm:$0xff] %vm493, %v808
        %817 = vst.msk [vmem:[%s397 + $0x18] sm:$0xff] %vm493, %v809
        %818 = vst.msk [vmem:[%s397 + $0x20] sm:$0xff] %vm493, %v810
        %819 = vst.msk [vmem:[%s397 + $0x28] sm:$0xff] %vm493, %v811
        %820 = vst.msk [vmem:[%s397 + $0x30] sm:$0xff] %vm493, %v812
        %821 = vst.msk [vmem:[%s397 + $0x38] sm:$0xff] %vm493, %v813
        %v822 = vld [vmem:[%s406] sm:$0xff]
        %v823 = vld [vmem:[%s406 + $0x8] sm:$0xff]
        %v824 = vld [vmem:[%s406 + $0x10] sm:$0xff]
        %v825 = vld [vmem:[%s406 + $0x18] sm:$0xff]
        %v826 = vld [vmem:[%s406 + $0x20] sm:$0xff]
        %v827 = vld [vmem:[%s406 + $0x28] sm:$0xff]
        %v828 = vld [vmem:[%s406 + $0x30] sm:$0xff]
        %v829 = vld [vmem:[%s406 + $0x38] sm:$0xff]
        %830 = vadd.xlane.f32.xlu0 %v654
        %v831 = vpop.xlane.xlu0 %830
        %832 = vadd.xlane.f32.xlu0 %v655
        %v833 = vpop.xlane.xlu0 %832
        %834 = vadd.xlane.f32.xlu0 %v656
        %v835 = vpop.xlane.xlu0 %834
        %836 = vadd.xlane.f32.xlu0 %v657
        %v837 = vpop.xlane.xlu0 %836
        %838 = vadd.xlane.f32.xlu0 %v689
        %v839 = vpop.xlane.xlu0 %838
        %840 = vadd.xlane.f32.xlu0 %v690
        %v841 = vpop.xlane.xlu0 %840
        %842 = vadd.xlane.f32.xlu0 %v691
        %v843 = vpop.xlane.xlu0 %842
        %844 = vadd.xlane.f32.xlu0 %v692
        %v845 = vpop.xlane.xlu0 %844
        %v846 = vadd.f32 %v822, %v831
        %v847 = vadd.f32 %v823, %v833
        %v848 = vadd.f32 %v824, %v835
        %v849 = vadd.f32 %v825, %v837
        %v850 = vadd.f32 %v826, %v839
        %v851 = vadd.f32 %v827, %v841
        %v852 = vadd.f32 %v828, %v843
        %v853 = vadd.f32 %v829, %v845
        %vm854 = vcmask 7168
        %855 = vst.msk [vmem:[%s406] sm:$0xff] %vm854, %v846
        %856 = vst.msk [vmem:[%s406 + $0x8] sm:$0xff] %vm854, %v847
        %857 = vst.msk [vmem:[%s406 + $0x10] sm:$0xff] %vm854, %v848
        %858 = vst.msk [vmem:[%s406 + $0x18] sm:$0xff] %vm854, %v849
        %859 = vst.msk [vmem:[%s406 + $0x20] sm:$0xff] %vm854, %v850
        %860 = vst.msk [vmem:[%s406 + $0x28] sm:$0xff] %vm854, %v851
        %861 = vst.msk [vmem:[%s406 + $0x30] sm:$0xff] %vm854, %v852
        %862 = vst.msk [vmem:[%s406 + $0x38] sm:$0xff] %vm854, %v853
        %p863 = scmp.lt.s32.totalorder %s22, 1
        %s864 = scalar_select %p863, %s22, 1
        %p865 = scmp.lt.s32.totalorder %s23, 1
        %s866 = scalar_select %p865, %s23, 1
        %s867 = smul.addr %s866, 8
        %s868 = smul.addr %s864, 16
        %s869 = sadd.s32 %s867, %s868
        %s870 = smul.addr %s869, 8
        %s871 = scalar_lea.vmem %s4, %s870
        %p872 = scmp.lt.s32.totalorder %s22, 1
        %s873 = scalar_select %p872, %s22, 1
        %p874 = scmp.lt.s32.totalorder %s23, 1
        %s875 = scalar_select %p874, %s23, 1
        %s876 = smul.addr %s875, 8
        %s877 = smul.addr %s873, 16
        %s878 = sadd.s32 %s876, %s877
        %s879 = smul.addr %s878, 8
        %s880 = scalar_lea.vmem %s5, %s879
        // Predicated region
        $region117: #{mglnet_forward.2} parent=103 // pred_check
          %p881 = pneg %p158
        $region118: #{mglnet_forward.2} parent=103 // pred_check_branch
          %883 = sbr.rel (%p881) target = $region120
        $region119: #{mglnet_forward.2} parent=103 // pred_region
          _
        $region120: #{mglnet_forward.2} parent=103 // pred_fallthru
          _
        // Predicated region
        $region121: #{mglnet_forward.2} parent=103 // pred_check
          %p884 = pneg %p186
        $region122: #{mglnet_forward.2} parent=103 // pred_check_branch
          %886 = sbr.rel (%p884) target = $region124
        $region123: #{mglnet_forward.2} parent=103 // pred_region
          _
        $region124: #{mglnet_forward.2} parent=103 // pred_fallthru
          _
      $region104: #{mglnet_forward.2} parent=5 // pred_fallthru
        _
      %p887 = scmp.le.s32.totalorder 2, %s12
      // Predicated region
      $region125: #{mglnet_forward.2} parent=5 // pred_check
        %p888 = pneg %p887
      $region126: #{mglnet_forward.2} parent=5 // pred_check_branch
        %890 = sbr.rel (%p888) target = $region128
      $region127: #{mglnet_forward.2} parent=5 // pred_region
        %s891 = ssub.s32 %s12, 2
        // Predicated region
        $region129: #{mglnet_forward.2} parent=127 // pred_check
          %p892 = pneg %p164
        $region130: #{mglnet_forward.2} parent=127 // pred_check_branch
          %894 = sbr.rel (%p892) target = $region132
        $region131: #{mglnet_forward.2} parent=127 // pred_region
          %p895 = scmp.lt.s32.totalorder %s25, 1
          %s896 = scalar_select %p895, %s25, 1
          %p897 = scmp.lt.s32.totalorder %s26, 1
          %s898 = scalar_select %p897, %s26, 1
          %s899 = smul.addr %s898, 8
          %s900 = smul.addr %s896, 16
          %s901 = sadd.s32 %s899, %s900
          %s902 = smul.addr %s901, 8
          %s903 = scalar_lea.vmem %s4, %s902
        $region132: #{mglnet_forward.2} parent=127 // pred_fallthru
          _
        // Predicated region
        $region133: #{mglnet_forward.2} parent=127 // pred_check
          %p904 = pneg %p192
        $region134: #{mglnet_forward.2} parent=127 // pred_check_branch
          %906 = sbr.rel (%p904) target = $region136
        $region135: #{mglnet_forward.2} parent=127 // pred_region
          %p907 = scmp.lt.s32.totalorder %s25, 1
          %s908 = scalar_select %p907, %s25, 1
          %p909 = scmp.lt.s32.totalorder %s26, 1
          %s910 = scalar_select %p909, %s26, 1
          %s911 = smul.addr %s910, 8
          %s912 = smul.addr %s908, 16
          %s913 = sadd.s32 %s911, %s912
          %s914 = smul.addr %s913, 8
          %s915 = scalar_lea.vmem %s5, %s914
        $region136: #{mglnet_forward.2} parent=127 // pred_fallthru
          _
      $region128: #{mglnet_forward.2} parent=5 // pred_fallthru
        _
    $region6: #{mglnet_forward.2} parent=1 // loop_footer
      %s16 = sadd.s32 1, %s12
    $region7: #{mglnet_forward.2} parent=1 // loop_footer_branch
      %11 = sbr.rel target = $region3
    $region8: #{mglnet_forward.2} parent=1 // loop_exit
      _

// kernel: mglnet_forward.3
$region0: #{mglnet_forward.3}
  #allocation0 [shape = 'u32[]', space=smem, size = 0x4, offset = 0x4, fixed_abs, tag = 'smem constant byte address 0x4 - core index']
  #allocation1 [shape = 'u32[144,128]{1,0:T(1,128)}', space=vmem, size = 0x12000, scoped, tag = 'internal scratch']
  %s0 = inlined_call_operand.vmem [shape: f32[2,32,256], index: 0, kind: input, shape index: {}]
  %s1 = inlined_call_operand.vmem [shape: f32[2,32,256], index: 1, kind: input, shape index: {}]
  %s2 = inlined_call_operand.vmem [shape: f32[64,64], index: 2, kind: input, shape index: {}]
  %s3 = inlined_call_operand.vmem [shape: f32[64,1], index: 3, kind: input, shape index: {}]
  %s4 = inlined_call_operand.vmem [shape: f32[2,64,64], index: 4, kind: input, shape index: {}]
  %s5 = inlined_call_operand.vmem [shape: f32[2,32,256], index: 5, kind: output, shape index: {0}]
  %s6 = inlined_call_operand.vmem [shape: f32[2,32,256], index: 6, kind: output, shape index: {1}]
  %7 = xla_tuple %s5, %s6
  %s8 = sld [smem:[#allocation0]]
  $region205: #{mglnet_forward.3} parent=0
    _
  %s10 = ssub.s32 1, %s8
  %s11 = scalar_select 0, %s10, %s8
  $region1: #{mglnet_forward.3} parent=0
    #allocation2 [shape = 'u8[32768]{0}', space=vmem, size = 0x8000, scoped, tag = 'input window, operand 0']
    #allocation3 [shape = 'u8[32768]{0}', space=vmem, size = 0x8000, scoped, tag = 'input window, operand 1']
    #allocation4 [shape = 'u8[32768]{0}', space=vmem, size = 0x8000, scoped, tag = 'output window, operand 0']
    #allocation5 [shape = 'u8[32768]{0}', space=vmem, size = 0x8000, scoped, tag = 'output window, operand 1']
    loop: start=0, step=1, limit=6
    $region2: #{mglnet_forward.3} parent=1 // loop_pre_header
      _
    $region3: #{mglnet_forward.3} parent=1 // loop_header
      %s13 = sphi 0, %s17
      %p14 = scmp.ge.s32.totalorder %s13, 6
      %s20 = sphi 0, %s32
      %s21 = sphi 0, %s28
      %s22 = sphi 0, %s20
      %s23 = sphi 0, %s21
      %s24 = sphi 0, %s22
      %s25 = sphi 0, %s23
      %s37 = sphi 0, %s39
      %s40 = sphi 0, %s37
      %s41 = sphi 0, %s40
      %s57 = sphi 0, %s41
      %s65 = sphi 0, %s67
      %s68 = sphi 0, %s65
      %s69 = sphi 0, %s68
      %s85 = sphi 0, %s69
      %s89 = sphi 0, %s89
      %s91 = sphi 0, %s89
      %s92 = sphi 0, %s91
      %s106 = sphi 0, %s92
      %s110 = sphi 0, %s110
      %s112 = sphi 0, %s110
      %s113 = sphi 0, %s112
      %s127 = sphi 0, %s113
      %s133 = sphi 0, %s135
      %s136 = sphi 0, %s133
      %s137 = sphi 0, %s136
      %s153 = sphi 0, %s137
      %s161 = sphi 0, %s163
      %s164 = sphi 0, %s161
      %s165 = sphi 0, %s164
      %s181 = sphi 0, %s165
      %s189 = sphi 0, %s191
      %s192 = sphi 0, %s189
      %s193 = sphi 0, %s192
      %s209 = sphi 0, %s193
    $region4: #{mglnet_forward.3} parent=1 // loop_header_branch
      %16 = sbr.rel (%p14) target = $region8
    $region5: #{mglnet_forward.3} parent=1 // loop_body
      %s18 = ssub.s32 %s13, 1
      %s19 = ssub.s32 %s13, 2
      %s26 = sadd.s32 1, %s21
      %p27 = scmp.ge.s32.totalorder %s26, 2
      %s28 = scalar_select %p27, 0, %s26
      %s29 = sadd.s32 1, %s20
      %s30 = scalar_select %p27, %s29, %s20
      %p31 = scmp.ge.s32.totalorder %s30, 2
      %s32 = scalar_select %p31, 0, %s30
      %s33 = ssub.s32 %s20, %s32
      %s34 = ssub.s32 %s21, %s28
      %s35 = sor.u32 %s33, %s34
      %p36 = scmp.eq.s32.totalorder %s35, 0
      %s38 = sadd.s32 %s37, 1
      %s39 = scalar_select %p36, %s37, %s38
      %p42 = pneg %p36
      %p43 = scmp.eq.s32.totalorder %s13, 3
      %p44 = por %p42, %p43
      %p45 = scmp.ne.s32.totalorder %s37, %s40
      %p46 = scmp.eq.s32.totalorder %s13, 0
      %p47 = por %p45, %p46
      %p48 = scmp.ne.s32.totalorder %s37, %s40
      %p49 = scmp.eq.s32.totalorder %s18, 3
      %p50 = por %p48, %p49
      %p51 = scmp.ne.s32.totalorder %s40, %s41
      %p52 = scmp.eq.s32.totalorder %s18, 0
      %p53 = por %p51, %p52
      %p54 = scmp.ne.s32.totalorder %s40, %s41
      %p55 = scmp.eq.s32.totalorder %s19, 3
      %p56 = por %p54, %p55
      %p58 = scmp.ne.s32.totalorder %s41, %s57
      %p59 = scmp.eq.s32.totalorder %s19, 0
      %p60 = por %p58, %p59
      %s61 = ssub.s32 %s20, %s32
      %s62 = ssub.s32 %s21, %s28
      %s63 = sor.u32 %s61, %s62
      %p64 = scmp.eq.s32.totalorder %s63, 0
      %s66 = sadd.s32 %s65, 1
      %s67 = scalar_select %p64, %s65, %s66
      %p70 = pneg %p64
      %p71 = scmp.eq.s32.totalorder %s13, 3
      %p72 = por %p70, %p71
      %p73 = scmp.ne.s32.totalorder %s65, %s68
      %p74 = scmp.eq.s32.totalorder %s13, 0
      %p75 = por %p73, %p74
      %p76 = scmp.ne.s32.totalorder %s65, %s68
      %p77 = scmp.eq.s32.totalorder %s18, 3
      %p78 = por %p76, %p77
      %p79 = scmp.ne.s32.totalorder %s68, %s69
      %p80 = scmp.eq.s32.totalorder %s18, 0
      %p81 = por %p79, %p80
      %p82 = scmp.ne.s32.totalorder %s68, %s69
      %p83 = scmp.eq.s32.totalorder %s19, 3
      %p84 = por %p82, %p83
      %p86 = scmp.ne.s32.totalorder %s69, %s85
      %p87 = scmp.eq.s32.totalorder %s19, 0
      %p88 = por %p86, %p87
      %s90 = sadd.s32 %s89, 1
      %p93 = scmp.eq.s32.totalorder %s13, 3
      %p94 = scmp.ne.s32.totalorder %s89, %s91
      %p95 = scmp.eq.s32.totalorder %s13, 0
      %p96 = por %p94, %p95
      %p97 = scmp.ne.s32.totalorder %s89, %s91
      %p98 = scmp.eq.s32.totalorder %s18, 3
      %p99 = por %p97, %p98
      %p100 = scmp.ne.s32.totalorder %s91, %s92
      %p101 = scmp.eq.s32.totalorder %s18, 0
      %p102 = por %p100, %p101
      %p103 = scmp.ne.s32.totalorder %s91, %s92
      %p104 = scmp.eq.s32.totalorder %s19, 3
      %p105 = por %p103, %p104
      %p107 = scmp.ne.s32.totalorder %s92, %s106
      %p108 = scmp.eq.s32.totalorder %s19, 0
      %p109 = por %p107, %p108
      %s111 = sadd.s32 %s110, 1
      %p114 = scmp.eq.s32.totalorder %s13, 3
      %p115 = scmp.ne.s32.totalorder %s110, %s112
      %p116 = scmp.eq.s32.totalorder %s13, 0
      %p117 = por %p115, %p116
      %p118 = scmp.ne.s32.totalorder %s110, %s112
      %p119 = scmp.eq.s32.totalorder %s18, 3
      %p120 = por %p118, %p119
      %p121 = scmp.ne.s32.totalorder %s112, %s113
      %p122 = scmp.eq.s32.totalorder %s18, 0
      %p123 = por %p121, %p122
      %p124 = scmp.ne.s32.totalorder %s112, %s113
      %p125 = scmp.eq.s32.totalorder %s19, 3
      %p126 = por %p124, %p125
      %p128 = scmp.ne.s32.totalorder %s113, %s127
      %p129 = scmp.eq.s32.totalorder %s19, 0
      %p130 = por %p128, %p129
      %s131 = ssub.s32 %s20, %s32
      %p132 = scmp.eq.s32.totalorder %s131, 0
      %s134 = sadd.s32 %s133, 1
      %s135 = scalar_select %p132, %s133, %s134
      %p138 = pneg %p132
      %p139 = scmp.eq.s32.totalorder %s13, 3
      %p140 = por %p138, %p139
      %p141 = scmp.ne.s32.totalorder %s133, %s136
      %p142 = scmp.eq.s32.totalorder %s13, 0
      %p143 = por %p141, %p142
      %p144 = scmp.ne.s32.totalorder %s133, %s136
      %p145 = scmp.eq.s32.totalorder %s18, 3
      %p146 = por %p144, %p145
      %p147 = scmp.ne.s32.totalorder %s136, %s137
      %p148 = scmp.eq.s32.totalorder %s18, 0
      %p149 = por %p147, %p148
      %p150 = scmp.ne.s32.totalorder %s136, %s137
      %p151 = scmp.eq.s32.totalorder %s19, 3
      %p152 = por %p150, %p151
      %p154 = scmp.ne.s32.totalorder %s137, %s153
      %p155 = scmp.eq.s32.totalorder %s19, 0
      %p156 = por %p154, %p155
      %s157 = ssub.s32 %s20, %s32
      %s158 = ssub.s32 %s21, %s28
      %s159 = sor.u32 %s157, %s158
      %p160 = scmp.eq.s32.totalorder %s159, 0
      %s162 = sadd.s32 %s161, 1
      %s163 = scalar_select %p160, %s161, %s162
      %p166 = pneg %p160
      %p167 = scmp.eq.s32.totalorder %s13, 3
      %p168 = por %p166, %p167
      %p169 = scmp.ne.s32.totalorder %s161, %s164
      %p170 = scmp.eq.s32.totalorder %s13, 0
      %p171 = por %p169, %p170
      %p172 = scmp.ne.s32.totalorder %s161, %s164
      %p173 = scmp.eq.s32.totalorder %s18, 3
      %p174 = por %p172, %p173
      %p175 = scmp.ne.s32.totalorder %s164, %s165
      %p176 = scmp.eq.s32.totalorder %s18, 0
      %p177 = por %p175, %p176
      %p178 = scmp.ne.s32.totalorder %s164, %s165
      %p179 = scmp.eq.s32.totalorder %s19, 3
      %p180 = por %p178, %p179
      %p182 = scmp.ne.s32.totalorder %s165, %s181
      %p183 = scmp.eq.s32.totalorder %s19, 0
      %p184 = por %p182, %p183
      %s185 = ssub.s32 %s20, %s32
      %s186 = ssub.s32 %s21, %s28
      %s187 = sor.u32 %s185, %s186
      %p188 = scmp.eq.s32.totalorder %s187, 0
      %s190 = sadd.s32 %s189, 1
      %s191 = scalar_select %p188, %s189, %s190
      %p194 = pneg %p188
      %p195 = scmp.eq.s32.totalorder %s13, 3
      %p196 = por %p194, %p195
      %p197 = scmp.ne.s32.totalorder %s189, %s192
      %p198 = scmp.eq.s32.totalorder %s13, 0
      %p199 = por %p197, %p198
      %p200 = scmp.ne.s32.totalorder %s189, %s192
      %p201 = scmp.eq.s32.totalorder %s18, 3
      %p202 = por %p200, %p201
      %p203 = scmp.ne.s32.totalorder %s192, %s193
      %p204 = scmp.eq.s32.totalorder %s18, 0
      %p205 = por %p203, %p204
      %p206 = scmp.ne.s32.totalorder %s192, %s193
      %p207 = scmp.eq.s32.totalorder %s19, 3
      %p208 = por %p206, %p207
      %p210 = scmp.ne.s32.totalorder %s193, %s209
      %p211 = scmp.eq.s32.totalorder %s19, 0
      %p212 = por %p210, %p211
      %p213 = scmp.le.s32.totalorder 1, %s13
      %p214 = scmp.lt.s32.totalorder %s13, 5
      %p215 = pnand %p213, %p214
      %p216 = pneg %p215
      // Predicated region
      $region9: #{mglnet_forward.3} parent=5 // pred_check
        _
      $region10: #{mglnet_forward.3} parent=5 // pred_check_branch
        %218 = sbr.rel (%p215) target = $region12
      $region11: #{mglnet_forward.3} parent=5 // pred_region
        %s219 = ssub.s32 %s13, 1
        // Predicated region
        $region13: #{mglnet_forward.3} parent=11 // pred_check
          %p220 = pneg %p102
        $region14: #{mglnet_forward.3} parent=11 // pred_check_branch
          %222 = sbr.rel (%p220) target = $region16
        $region15: #{mglnet_forward.3} parent=11 // pred_region
          _
        $region16: #{mglnet_forward.3} parent=11 // pred_fallthru
          _
        // Predicated region
        $region17: #{mglnet_forward.3} parent=11 // pred_check
          %p223 = pneg %p123
        $region18: #{mglnet_forward.3} parent=11 // pred_check_branch
          %225 = sbr.rel (%p223) target = $region20
        $region19: #{mglnet_forward.3} parent=11 // pred_region
          _
        $region20: #{mglnet_forward.3} parent=11 // pred_fallthru
          _
      $region12: #{mglnet_forward.3} parent=5 // pred_fallthru
        _
      %p226 = scmp.lt.s32.totalorder %s13, 4
      // Predicated region
      $region21: #{mglnet_forward.3} parent=5 // pred_check
        %p227 = pneg %p226
      $region22: #{mglnet_forward.3} parent=5 // pred_check_branch
        %229 = sbr.rel (%p227) target = $region24
      $region23: #{mglnet_forward.3} parent=5 // pred_region
        // Predicated region
        $region25: #{mglnet_forward.3} parent=23 // pred_check
          %p230 = pneg %p47
        $region26: #{mglnet_forward.3} parent=23 // pred_check_branch
          %232 = sbr.rel (%p230) target = $region28
        $region27: #{mglnet_forward.3} parent=23 // pred_region
          %s233 = sand.u32 %s37, 1
          %s234 = sand.u32 %s37, 1
          %s235 = smul.addr %s234, 32
          %s236 = scalar_lea.vmem [#allocation2], %s235
          %s237 = smul.addr %s20, 8
          %s238 = sadd.s32 %s21, %s237
          %s239 = smul.addr %s238, 8
          %s240 = scalar_lea.vmem %s0, %s239
          // Predicated region
          $region29: #{mglnet_forward.3} parent=27 // pred_check
            _
          $region30: #{mglnet_forward.3} parent=27 // pred_check_branch
            %242 = sbr.rel (0) target = $region32
          $region31: #{mglnet_forward.3} parent=27 // pred_region
            // Predicated region
            $region33: #{mglnet_forward.3} parent=31 // pred_check
              _
            $region34: #{mglnet_forward.3} parent=31 // pred_check_branch
              %244 = sbr.rel (0) target = $region36
            $region35: #{mglnet_forward.3} parent=31 // pred_region
              // Predicated region
              $region48: #{mglnet_forward.3} parent=35 // pred_check
                _
              $region49: #{mglnet_forward.3} parent=35 // pred_check_branch
                %266 = sbr.rel (0) target = $region51
              $region50: #{mglnet_forward.3} parent=35 // pred_region
                loop: start=0, step=1, limit=1
                $region52: #{mglnet_forward.3} parent=50 // loop_pre_header
                  _
                $region53: #{mglnet_forward.3} parent=50 // loop_header
                  %s268 = sphi 0, %s272
                  %p269 = scmp.ge.s32.totalorder %s268, 1
                  %s273 = sphi %s240, %s240
                  %s274 = sphi %s236, %s236
                $region54: #{mglnet_forward.3} parent=50 // loop_header_branch
                  %271 = sbr.rel (%p269) target = $region58
                $region55: #{mglnet_forward.3} parent=50 // loop_body
                  %v275 = vld [vmem:[%s273] sm:$0xff]
                  %276 = vst [vmem:[%s274] sm:$0xff] %v275
                  %v277 = vld [vmem:[%s273 + $0x10] sm:$0xff]
                  %278 = vst [vmem:[%s274 + $0x8] sm:$0xff] %v277
                  %v279 = vld [vmem:[%s273 + $0x20] sm:$0xff]
                  %280 = vst [vmem:[%s274 + $0x10] sm:$0xff] %v279
                  %v281 = vld [vmem:[%s273 + $0x30] sm:$0xff]
                  %282 = vst [vmem:[%s274 + $0x18] sm:$0xff] %v281
                $region56: #{mglnet_forward.3} parent=50 // loop_footer
                  %s272 = sadd.s32 1, %s268
                $region57: #{mglnet_forward.3} parent=50 // loop_footer_branch
                  %267 = sbr.rel target = $region53
                $region58: #{mglnet_forward.3} parent=50 // loop_exit
                  _
              $region51: #{mglnet_forward.3} parent=35 // pred_fallthru
                _
              // Predicated region
              $region59: #{mglnet_forward.3} parent=35 // pred_check
                _
              $region60: #{mglnet_forward.3} parent=35 // pred_check_branch
                %284 = sbr.rel target = $region62
              $region61: #{mglnet_forward.3} parent=35 // pred_region
                _
              $region62: #{mglnet_forward.3} parent=35 // pred_fallthru
                _
            $region36: #{mglnet_forward.3} parent=31 // pred_fallthru
              _
            // Predicated region
            $region37: #{mglnet_forward.3} parent=31 // pred_check
              _
            $region38: #{mglnet_forward.3} parent=31 // pred_check_branch
              %246 = sbr.rel target = $region40
            $region39: #{mglnet_forward.3} parent=31 // pred_region
              %s248 = ssub.s32 256, 1
              loop: start=0, step=1, limit=1
              $region41: #{mglnet_forward.3} parent=39 // loop_pre_header
                _
              $region42: #{mglnet_forward.3} parent=39 // loop_header
                %s250 = sphi 0, %s254
                %p251 = scmp.ge.s32.totalorder %s250, 1
                %s255 = sphi %s240, %s240
                %s256 = sphi %s236, %s236
              $region43: #{mglnet_forward.3} parent=39 // loop_header_branch
                %253 = sbr.rel (%p251) target = $region47
              $region44: #{mglnet_forward.3} parent=39 // loop_body
                %v257 = vld [vmem:[%s255] sm:%s248]
                %258 = vst [vmem:[%s256] sm:%s248] %v257
                %v259 = vld [vmem:[%s255 + $0x10] sm:%s248]
                %260 = vst [vmem:[%s256 + $0x8] sm:%s248] %v259
                %v261 = vld [vmem:[%s255 + $0x20] sm:%s248]
                %262 = vst [vmem:[%s256 + $0x10] sm:%s248] %v261
                %v263 = vld [vmem:[%s255 + $0x30] sm:%s248]
                %264 = vst [vmem:[%s256 + $0x18] sm:%s248] %v263
              $region45: #{mglnet_forward.3} parent=39 // loop_footer
                %s254 = sadd.s32 1, %s250
              $region46: #{mglnet_forward.3} parent=39 // loop_footer_branch
                %249 = sbr.rel target = $region42
              $region47: #{mglnet_forward.3} parent=39 // loop_exit
                _
            $region40: #{mglnet_forward.3} parent=31 // pred_fallthru
              _
          $region32: #{mglnet_forward.3} parent=27 // pred_fallthru
            _
          %285 = vnop
        $region28: #{mglnet_forward.3} parent=23 // pred_fallthru
          _
        // Predicated region
        $region63: #{mglnet_forward.3} parent=23 // pred_check
          %p286 = pneg %p75
        $region64: #{mglnet_forward.3} parent=23 // pred_check_branch
          %288 = sbr.rel (%p286) target = $region66
        $region65: #{mglnet_forward.3} parent=23 // pred_region
          %s289 = sand.u32 %s65, 1
          %s290 = sand.u32 %s65, 1
          %s291 = smul.addr %s290, 32
          %s292 = scalar_lea.vmem [#allocation3], %s291
          %s293 = smul.addr %s20, 8
          %s294 = sadd.s32 %s21, %s293
          %s295 = smul.addr %s294, 8
          %s296 = scalar_lea.vmem %s1, %s295
          // Predicated region
          $region67: #{mglnet_forward.3} parent=65 // pred_check
            _
          $region68: #{mglnet_forward.3} parent=65 // pred_check_branch
            %298 = sbr.rel (0) target = $region70
          $region69: #{mglnet_forward.3} parent=65 // pred_region
            // Predicated region
            $region71: #{mglnet_forward.3} parent=69 // pred_check
              _
            $region72: #{mglnet_forward.3} parent=69 // pred_check_branch
              %300 = sbr.rel (0) target = $region74
            $region73: #{mglnet_forward.3} parent=69 // pred_region
              // Predicated region
              $region86: #{mglnet_forward.3} parent=73 // pred_check
                _
              $region87: #{mglnet_forward.3} parent=73 // pred_check_branch
                %322 = sbr.rel (0) target = $region89
              $region88: #{mglnet_forward.3} parent=73 // pred_region
                loop: start=0, step=1, limit=1
                $region90: #{mglnet_forward.3} parent=88 // loop_pre_header
                  _
                $region91: #{mglnet_forward.3} parent=88 // loop_header
                  %s324 = sphi 0, %s328
                  %p325 = scmp.ge.s32.totalorder %s324, 1
                  %s329 = sphi %s296, %s296
                  %s330 = sphi %s292, %s292
                $region92: #{mglnet_forward.3} parent=88 // loop_header_branch
                  %327 = sbr.rel (%p325) target = $region96
                $region93: #{mglnet_forward.3} parent=88 // loop_body
                  %v331 = vld [vmem:[%s329] sm:$0xff]
                  %332 = vst [vmem:[%s330] sm:$0xff] %v331
                  %v333 = vld [vmem:[%s329 + $0x10] sm:$0xff]
                  %334 = vst [vmem:[%s330 + $0x8] sm:$0xff] %v333
                  %v335 = vld [vmem:[%s329 + $0x20] sm:$0xff]
                  %336 = vst [vmem:[%s330 + $0x10] sm:$0xff] %v335
                  %v337 = vld [vmem:[%s329 + $0x30] sm:$0xff]
                  %338 = vst [vmem:[%s330 + $0x18] sm:$0xff] %v337
                $region94: #{mglnet_forward.3} parent=88 // loop_footer
                  %s328 = sadd.s32 1, %s324
                $region95: #{mglnet_forward.3} parent=88 // loop_footer_branch
                  %323 = sbr.rel target = $region91
                $region96: #{mglnet_forward.3} parent=88 // loop_exit
                  _
              $region89: #{mglnet_forward.3} parent=73 // pred_fallthru
                _
              // Predicated region
              $region97: #{mglnet_forward.3} parent=73 // pred_check
                _
              $region98: #{mglnet_forward.3} parent=73 // pred_check_branch
                %340 = sbr.rel target = $region100
              $region99: #{mglnet_forward.3} parent=73 // pred_region
                _
              $region100: #{mglnet_forward.3} parent=73 // pred_fallthru
                _
            $region74: #{mglnet_forward.3} parent=69 // pred_fallthru
              _
            // Predicated region
            $region75: #{mglnet_forward.3} parent=69 // pred_check
              _
            $region76: #{mglnet_forward.3} parent=69 // pred_check_branch
              %302 = sbr.rel target = $region78
            $region77: #{mglnet_forward.3} parent=69 // pred_region
              %s304 = ssub.s32 256, 1
              loop: start=0, step=1, limit=1
              $region79: #{mglnet_forward.3} parent=77 // loop_pre_header
                _
              $region80: #{mglnet_forward.3} parent=77 // loop_header
                %s306 = sphi 0, %s310
                %p307 = scmp.ge.s32.totalorder %s306, 1
                %s311 = sphi %s296, %s296
                %s312 = sphi %s292, %s292
              $region81: #{mglnet_forward.3} parent=77 // loop_header_branch
                %309 = sbr.rel (%p307) target = $region85
              $region82: #{mglnet_forward.3} parent=77 // loop_body
                %v313 = vld [vmem:[%s311] sm:%s304]
                %314 = vst [vmem:[%s312] sm:%s304] %v313
                %v315 = vld [vmem:[%s311 + $0x10] sm:%s304]
                %316 = vst [vmem:[%s312 + $0x8] sm:%s304] %v315
                %v317 = vld [vmem:[%s311 + $0x20] sm:%s304]
                %318 = vst [vmem:[%s312 + $0x10] sm:%s304] %v317
                %v319 = vld [vmem:[%s311 + $0x30] sm:%s304]
                %320 = vst [vmem:[%s312 + $0x18] sm:%s304] %v319
              $region83: #{mglnet_forward.3} parent=77 // loop_footer
                %s310 = sadd.s32 1, %s306
              $region84: #{mglnet_forward.3} parent=77 // loop_footer_branch
                %305 = sbr.rel target = $region80
              $region85: #{mglnet_forward.3} parent=77 // loop_exit
                _
            $region78: #{mglnet_forward.3} parent=69 // pred_fallthru
              _
          $region70: #{mglnet_forward.3} parent=65 // pred_fallthru
            _
          %341 = vnop
        $region66: #{mglnet_forward.3} parent=23 // pred_fallthru
          _
        // Predicated region
        $region101: #{mglnet_forward.3} parent=23 // pred_check
          %p342 = pneg %p143
        $region102: #{mglnet_forward.3} parent=23 // pred_check_branch
          %344 = sbr.rel (%p342) target = $region104
        $region103: #{mglnet_forward.3} parent=23 // pred_region
          %p345 = scmp.lt.s32.totalorder %s20, 1
          %s346 = scalar_select %p345, %s20, 1
          %s347 = smul.addr %s346, 8
          %s348 = smul.addr %s347, 8
          %s349 = scalar_lea.vmem %s4, %s348
        $region104: #{mglnet_forward.3} parent=23 // pred_fallthru
          _
      $region24: #{mglnet_forward.3} parent=5 // pred_fallthru
        _
      %p350 = scmp.le.s32.totalorder 1, %s13
      %p351 = scmp.lt.s32.totalorder %s13, 5
      %p352 = pnand %p350, %p351
      %p353 = pneg %p352
      // Predicated region
      $region105: #{mglnet_forward.3} parent=5 // pred_check
        _
      $region106: #{mglnet_forward.3} parent=5 // pred_check_branch
        %355 = sbr.rel (%p352) target = $region108
      $region107: #{mglnet_forward.3} parent=5 // pred_region
        %s356 = ssub.s32 %s13, 1
        %s357 = sand.u32 %s40, 1
        %s358 = sand.u32 %s40, 1
        %s359 = smul.addr %s358, 32
        %s360 = scalar_lea.vmem [#allocation2], %s359
        // Predicated region
        $region109: #{mglnet_forward.3} parent=107 // pred_check
          %p361 = pneg %p53
        $region110: #{mglnet_forward.3} parent=107 // pred_check_branch
          %363 = sbr.rel (%p361) target = $region112
        $region111: #{mglnet_forward.3} parent=107 // pred_region
          _
        $region112: #{mglnet_forward.3} parent=107 // pred_fallthru
          _
        %s364 = sand.u32 %s68, 1
        %s365 = sand.u32 %s68, 1
        %s366 = smul.addr %s365, 32
        %s367 = scalar_lea.vmem [#allocation3], %s366
        // Predicated region
        $region113: #{mglnet_forward.3} parent=107 // pred_check
          %p368 = pneg %p81
        $region114: #{mglnet_forward.3} parent=107 // pred_check_branch
          %370 = sbr.rel (%p368) target = $region116
        $region115: #{mglnet_forward.3} parent=107 // pred_region
          _
        $region116: #{mglnet_forward.3} parent=107 // pred_fallthru
          _
        %s371 = sand.u32 %s40, 1
        %s372 = sand.u32 %s40, 1
        %s373 = smul.addr %s372, 32
        %s374 = scalar_lea.vmem [#allocation2], %s373
        %p375 = pneg %p53
        %p376 = pneg %p50
        %s377 = sand.u32 %s68, 1
        %s378 = sand.u32 %s68, 1
        %s379 = smul.addr %s378, 32
        %s380 = scalar_lea.vmem [#allocation3], %s379
        %p381 = pneg %p81
        %p382 = pneg %p78
        %p383 = pneg %p102
        %p384 = pneg %p99
        %p385 = pneg %p123
        %p386 = pneg %p120
        %p387 = scmp.lt.s32.totalorder %s22, 1
        %s388 = scalar_select %p387, %s22, 1
        %s389 = smul.addr %s388, 8
        %s390 = smul.addr %s389, 8
        %s391 = scalar_lea.vmem %s4, %s390
        %p392 = pneg %p149
        %p393 = pneg %p146
        %p394 = pneg %p177
        %p395 = pneg %p174
        %s396 = sand.u32 %s164, 1
        %s397 = sand.u32 %s164, 1
        %s398 = smul.addr %s397, 32
        %s399 = scalar_lea.vmem [#allocation4], %s398
        %p400 = pneg %p205
        %p401 = pneg %p202
        %s402 = sand.u32 %s192, 1
        %s403 = sand.u32 %s192, 1
        %s404 = smul.addr %s403, 32
        %s405 = scalar_lea.vmem [#allocation5], %s404
        %p406 = scmp.lt.s32.totalorder %s22, 1
        %s407 = scalar_select %p406, %s22, 1
        %s408 = smul.addr %s407, 8
        %s409 = smul.addr %s408, 8
        %s410 = scalar_lea.vmem %s4, %s409
        %v411 = vld [vmem:[%s360] sm:$0xff]
        %v412 = vld [vmem:[%s360 + $0x8] sm:$0xff]
        %v413 = vld [vmem:[%s360 + $0x10] sm:$0xff]
        %v414 = vld [vmem:[%s360 + $0x18] sm:$0xff]
        %v415 = vld [vmem:[%s367] sm:$0xff]
        %v416 = vld [vmem:[%s367 + $0x8] sm:$0xff]
        %v417 = vld [vmem:[%s367 + $0x10] sm:$0xff]
        %v418 = vld [vmem:[%s367 + $0x18] sm:$0xff]
        %v419 = vld [vmem:[%s2] sm:$0xff]
        %v420 = vld [vmem:[%s2 + $0x8] sm:$0xff]
        %v421 = vld [vmem:[%s2 + $0x10] sm:$0xff]
        %v422 = vld [vmem:[%s2 + $0x18] sm:$0xff]
        %v423 = vld [vmem:[%s2 + $0x20] sm:$0xff]
        %v424 = vld [vmem:[%s2 + $0x28] sm:$0xff]
        %v425 = vld [vmem:[%s2 + $0x30] sm:$0xff]
        %v426 = vld [vmem:[%s2 + $0x38] sm:$0xff]
        %v427 = vld [vmem:[%s3] sm:$0xff]
        %v428 = vld [vmem:[%s3 + $0x8] sm:$0xff]
        %v429 = vld [vmem:[%s3 + $0x10] sm:$0xff]
        %v430 = vld [vmem:[%s3 + $0x18] sm:$0xff]
        %v431 = vld [vmem:[%s3 + $0x20] sm:$0xff]
        %v432 = vld [vmem:[%s3 + $0x28] sm:$0xff]
        %v433 = vld [vmem:[%s3 + $0x30] sm:$0xff]
        %v434 = vld [vmem:[%s3 + $0x38] sm:$0xff]
        %436 = vset.pattern.permute.xlu0 0
        %437 = vperm.xlu0 %436, %v427
        %v438 = vpop.permute.xlu0 %437
        %441 = vset.pattern.permute.xlu0 0
        %442 = vperm.xlu0 %441, %v428
        %v443 = vpop.permute.xlu0 %442
        %446 = vset.pattern.permute.xlu0 0
        %447 = vperm.xlu0 %446, %v429
        %v448 = vpop.permute.xlu0 %447
        %451 = vset.pattern.permute.xlu0 0
        %452 = vperm.xlu0 %451, %v430
        %v453 = vpop.permute.xlu0 %452
        %456 = vset.pattern.permute.xlu0 0
        %457 = vperm.xlu0 %456, %v431
        %v458 = vpop.permute.xlu0 %457
        %461 = vset.pattern.permute.xlu0 0
        %462 = vperm.xlu0 %461, %v432
        %v463 = vpop.permute.xlu0 %462
        %466 = vset.pattern.permute.xlu0 0
        %467 = vperm.xlu0 %466, %v433
        %v468 = vpop.permute.xlu0 %467
        %471 = vset.pattern.permute.xlu0 0
        %472 = vperm.xlu0 %471, %v434
        %v473 = vpop.permute.xlu0 %472
        %vm475 = vcmask 523264
        %v477 = vsel %vm475, %v419, 0
        %v480 = vsel %vm475, %v420, 0
        %v483 = vsel %vm475, %v421, 0
        %v486 = vsel %vm475, %v422, 0
        %v489 = vsel %vm475, %v423, 0
        %v492 = vsel %vm475, %v424, 0
        %v495 = vsel %vm475, %v425, 0
        %v498 = vsel %vm475, %v426, 0
        %500 = vmatprep.subr.mxu0 0.0
        %501 = vmatpush1.msra.mxu0 0.0
        %502 = vmatprep.subr.mxu0 0.0
        %503 = vmatpush1.msra.mxu0 0.0
        %504 = vmatprep.subr.mxu0 0.0
        %505 = vmatpush1.msra.mxu0 0.0
        %506 = vmatprep.subr.mxu0 0.0
        %507 = vmatpush1.msra.mxu0 0.0
        %508 = vmatprep.subr.mxu0 0.0
        %509 = vmatpush1.msra.mxu0 0.0
        %510 = vmatprep.subr.mxu0 0.0
        %511 = vmatpush1.msra.mxu0 0.0
        %512 = vmatprep.subr.mxu0 0.0
        %513 = vmatpush1.msra.mxu0 0.0
        %514 = vmatprep.subr.mxu0 0.0
        %515 = vmatpush1.msra.mxu0 0.0
        %516 = vmatprep.subr.mxu0 0.0
        %517 = vmatpush1.msra.mxu0 %v418
        %518 = vmatprep.subr.mxu0 0.0
        %519 = vmatpush1.msra.mxu0 %v417
        %520 = vmatprep.subr.mxu0 0.0
        %521 = vmatpush1.msra.mxu0 %v416
        %522 = vmatprep.subr.mxu0 0.0
        %523 = vmatpush1.msra.mxu0 %v415
        %524 = vmatprep.subr.mxu0 0.0
        %525 = vmatpush1.msra.mxu0 %v414
        %526 = vmatprep.subr.mxu0 0.0
        %527 = vmatpush1.msra.mxu0 %v413
        %528 = vmatprep.subr.mxu0 0.0
        %529 = vmatpush1.msra.mxu0 %v412
        %530 = vmatprep.subr.mxu0 0.0
        %531 = vmatpush1.msra.mxu0 %v411
        %532 = vmatprep.subr.mxu0 0.0
        %533 = vmatpush2.msra.mxu0 0.0
        %534 = vmatprep.subr.mxu0 0.0
        %535 = vmatpush2.msra.mxu0 0.0
        %536 = vmatprep.subr.mxu0 0.0
        %537 = vmatpush2.msra.mxu0 0.0
        %538 = vmatprep.subr.mxu0 0.0
        %539 = vmatpush2.msra.mxu0 0.0
        %540 = vmatprep.subr.mxu0 0.0
        %541 = vmatpush2.msra.mxu0 0.0
        %542 = vmatprep.subr.mxu0 0.0
        %543 = vmatpush2.msra.mxu0 0.0
        %544 = vmatprep.subr.mxu0 0.0
        %545 = vmatpush2.msra.mxu0 0.0
        %546 = vmatprep.subr.mxu0 0.0
        %547 = vmatpush2.msra.mxu0 0.0
        %548 = vmatprep.subr.mxu0 0.0
        %549 = vmatpush2.msra.mxu0 0.0
        %550 = vmatprep.subr.mxu0 0.0
        %551 = vmatpush2.msra.mxu0 0.0
        %552 = vmatprep.subr.mxu0 0.0
        %553 = vmatpush2.msra.mxu0 0.0
        %554 = vmatprep.subr.mxu0 0.0
        %555 = vmatpush2.msra.mxu0 0.0
        %556 = vmatprep.subr.mxu0 0.0
        %557 = vmatpush2.msra.mxu0 0.0
        %558 = vmatprep.subr.mxu0 0.0
        %559 = vmatpush2.msra.mxu0 0.0
        %560 = vmatprep.subr.mxu0 0.0
        %561 = vmatpush2.msra.mxu0 0.0
        %562 = vmatprep.subr.mxu0 0.0
        %563 = vmatpush2.msra.mxu0 0.0
        %564 = vmatprep.mubr.f32.mxu0 0.0
        %565 = vmatmul.mubr.f32.gmra.mxu0 %v477
        %v566 = vpop.f32.mrf.mxu0
        %v567 = vadd.f32 %v438, %v566
        %v568 = vpop.f32.mrf.mxu0
        %569 = vmatprep.mubr.f32.mxu0 0.0
        %570 = vmatmul.mubr.f32.gmra.mxu0 %v480
        %v571 = vpop.f32.mrf.mxu0
        %v572 = vadd.f32 %v443, %v571
        %v573 = vpop.f32.mrf.mxu0
        %574 = vmatprep.mubr.f32.mxu0 0.0
        %575 = vmatmul.mubr.f32.gmra.mxu0 %v483
        %v576 = vpop.f32.mrf.mxu0
        %v577 = vadd.f32 %v448, %v576
        %v578 = vpop.f32.mrf.mxu0
        %579 = vmatprep.mubr.f32.mxu0 0.0
        %580 = vmatmul.mubr.f32.gmra.mxu0 %v486
        %v581 = vpop.f32.mrf.mxu0
        %v582 = vadd.f32 %v453, %v581
        %v583 = vpop.f32.mrf.mxu0
        %584 = vmatprep.mubr.f32.mxu0 0.0
        %585 = vmatmul.mubr.f32.gmra.mxu0 %v489
        %v586 = vpop.f32.mrf.mxu0
        %v587 = vadd.f32 %v458, %v586
        %v588 = vpop.f32.mrf.mxu0
        %589 = vmatprep.mubr.f32.mxu0 0.0
        %590 = vmatmul.mubr.f32.gmra.mxu0 %v492
        %v591 = vpop.f32.mrf.mxu0
        %v592 = vadd.f32 %v463, %v591
        %v593 = vpop.f32.mrf.mxu0
        %594 = vmatprep.mubr.f32.mxu0 0.0
        %595 = vmatmul.mubr.f32.gmra.mxu0 %v495
        %v596 = vpop.f32.mrf.mxu0
        %v597 = vadd.f32 %v468, %v596
        %v598 = vpop.f32.mrf.mxu0
        %599 = vmatprep.mubr.f32.mxu0 0.0
        %600 = vmatmul.mubr.f32.gmra.mxu0 %v498
        %v601 = vpop.f32.mrf.mxu0
        %v602 = vadd.f32 %v473, %v601
        %v603 = vpop.f32.mrf.mxu0
        %604 = vdwg.mxu0
        %v605 = vmax.f32 %v567, %v572
        %v606 = vmax.f32 %v577, %v582
        %v607 = vmax.f32 %v605, %v606
        %v608 = vrot.slane %v607, 4
        %v609 = vmax.f32 %v607, %v608
        %v610 = vrot.slane %v609, 2
        %v611 = vmax.f32 %v609, %v610
        %v612 = vrot.slane %v611, 1
        %v613 = vmax.f32 %v611, %v612
        %v614 = vsub.f32 %v567, %v613
        %v615 = vsub.f32 %v572, %v613
        %v616 = vsub.f32 %v577, %v613
        %v617 = vsub.f32 %v582, %v613
        %v618 = vmul.f32 %v614, 1.442695
        %v619 = vpow.pop %v618
        %v620 = vmul.f32 %v615, 1.442695
        %v621 = vpow.pop %v620
        %v622 = vmul.f32 %v616, 1.442695
        %v623 = vpow.pop %v622
        %v624 = vmul.f32 %v617, 1.442695
        %v625 = vpow.pop %v624
        %v626 = vadd.f32 %v619, %v621
        %v627 = vadd.f32 %v626, %v623
        %v628 = vadd.f32 %v627, %v625
        %v629 = vrot.slane %v628, 4
        %v630 = vadd.f32 %v628, %v629
        %v631 = vrot.slane %v630, 2
        %v632 = vadd.f32 %v630, %v631
        %v633 = vrot.slane %v632, 1
        %v634 = vadd.f32 %v632, %v633
        %v635 = vrcp.pop %v634
        %v636 = vmul.f32 %v619, %v635
        %v637 = vmul.f32 %v621, %v635
        %v638 = vmul.f32 %v623, %v635
        %v639 = vmul.f32 %v625, %v635
        %v640 = vmax.f32 %v587, %v592
        %v641 = vmax.f32 %v597, %v602
        %v642 = vmax.f32 %v640, %v641
        %v643 = vrot.slane %v642, 4
        %v644 = vmax.f32 %v642, %v643
        %v645 = vrot.slane %v644, 2
        %v646 = vmax.f32 %v644, %v645
        %v647 = vrot.slane %v646, 1
        %v648 = vmax.f32 %v646, %v647
        %v649 = vsub.f32 %v587, %v648
        %v650 = vsub.f32 %v592, %v648
        %v651 = vsub.f32 %v597, %v648
        %v652 = vsub.f32 %v602, %v648
        %v653 = vmul.f32 %v649, 1.442695
        %v654 = vpow.pop %v653
        %v655 = vmul.f32 %v650, 1.442695
        %v656 = vpow.pop %v655
        %v657 = vmul.f32 %v651, 1.442695
        %v658 = vpow.pop %v657
        %v659 = vmul.f32 %v652, 1.442695
        %v660 = vpow.pop %v659
        %v661 = vadd.f32 %v654, %v656
        %v662 = vadd.f32 %v661, %v658
        %v663 = vadd.f32 %v662, %v660
        %v664 = vrot.slane %v663, 4
        %v665 = vadd.f32 %v663, %v664
        %v666 = vrot.slane %v665, 2
        %v667 = vadd.f32 %v665, %v666
        %v668 = vrot.slane %v667, 1
        %v669 = vadd.f32 %v667, %v668
        %v670 = vrcp.pop %v669
        %v671 = vmul.f32 %v654, %v670
        %v672 = vmul.f32 %v656, %v670
        %v673 = vmul.f32 %v658, %v670
        %v674 = vmul.f32 %v660, %v670
        %v675 = vld [vmem:[%s410] sm:$0xff]
        %v676 = vld [vmem:[%s410 + $0x8] sm:$0xff]
        %v677 = vld [vmem:[%s410 + $0x10] sm:$0xff]
        %v678 = vld [vmem:[%s410 + $0x18] sm:$0xff]
        %v679 = vld [vmem:[%s410 + $0x20] sm:$0xff]
        %v680 = vld [vmem:[%s410 + $0x28] sm:$0xff]
        %v681 = vld [vmem:[%s410 + $0x30] sm:$0xff]
        %v682 = vld [vmem:[%s410 + $0x38] sm:$0xff]
        %v684 = vsel %vm475, %v675, 0
        %v687 = vsel %vm475, %v676, 0
        %v690 = vsel %vm475, %v677, 0
        %v693 = vsel %vm475, %v678, 0
        %v696 = vsel %vm475, %v679, 0
        %v699 = vsel %vm475, %v680, 0
        %v702 = vsel %vm475, %v681, 0
        %v705 = vsel %vm475, %v682, 0
        %707 = vmatprep.subr.mxu0 0.0
        %708 = vmatpush1.msra.mxu0 0.0
        %709 = vmatprep.subr.mxu0 0.0
        %710 = vmatpush1.msra.mxu0 0.0
        %711 = vmatprep.subr.mxu0 0.0
        %712 = vmatpush1.msra.mxu0 0.0
        %713 = vmatprep.subr.mxu0 0.0
        %714 = vmatpush1.msra.mxu0 0.0
        %715 = vmatprep.subr.mxu0 0.0
        %716 = vmatpush1.msra.mxu0 0.0
        %717 = vmatprep.subr.mxu0 0.0
        %718 = vmatpush1.msra.mxu0 0.0
        %719 = vmatprep.subr.mxu0 0.0
        %720 = vmatpush1.msra.mxu0 0.0
        %721 = vmatprep.subr.mxu0 0.0
        %722 = vmatpush1.msra.mxu0 0.0
        %723 = vmatprep.subr.mxu0 0.0
        %724 = vmatpush1.msra.mxu0 %v674
        %725 = vmatprep.subr.mxu0 0.0
        %726 = vmatpush1.msra.mxu0 %v673
        %727 = vmatprep.subr.mxu0 0.0
        %728 = vmatpush1.msra.mxu0 %v672
        %729 = vmatprep.subr.mxu0 0.0
        %730 = vmatpush1.msra.mxu0 %v671
        %731 = vmatprep.subr.mxu0 0.0
        %732 = vmatpush1.msra.mxu0 %v639
        %733 = vmatprep.subr.mxu0 0.0
        %734 = vmatpush1.msra.mxu0 %v638
        %735 = vmatprep.subr.mxu0 0.0
        %736 = vmatpush1.msra.mxu0 %v637
        %737 = vmatprep.subr.mxu0 0.0
        %738 = vmatpush1.msra.mxu0 %v636
        %739 = vmatprep.subr.mxu0 0.0
        %740 = vmatpush2.msra.mxu0 0.0
        %741 = vmatprep.subr.mxu0 0.0
        %742 = vmatpush2.msra.mxu0 0.0
        %743 = vmatprep.subr.mxu0 0.0
        %744 = vmatpush2.msra.mxu0 0.0
        %745 = vmatprep.subr.mxu0 0.0
        %746 = vmatpush2.msra.mxu0 0.0
        %747 = vmatprep.subr.mxu0 0.0
        %748 = vmatpush2.msra.mxu0 0.0
        %749 = vmatprep.subr.mxu0 0.0
        %750 = vmatpush2.msra.mxu0 0.0
        %751 = vmatprep.subr.mxu0 0.0
        %752 = vmatpush2.msra.mxu0 0.0
        %753 = vmatprep.subr.mxu0 0.0
        %754 = vmatpush2.msra.mxu0 0.0
        %755 = vmatprep.subr.mxu0 0.0
        %756 = vmatpush2.msra.mxu0 0.0
        %757 = vmatprep.subr.mxu0 0.0
        %758 = vmatpush2.msra.mxu0 0.0
        %759 = vmatprep.subr.mxu0 0.0
        %760 = vmatpush2.msra.mxu0 0.0
        %761 = vmatprep.subr.mxu0 0.0
        %762 = vmatpush2.msra.mxu0 0.0
        %763 = vmatprep.subr.mxu0 0.0
        %764 = vmatpush2.msra.mxu0 0.0
        %765 = vmatprep.subr.mxu0 0.0
        %766 = vmatpush2.msra.mxu0 0.0
        %767 = vmatprep.subr.mxu0 0.0
        %768 = vmatpush2.msra.mxu0 0.0
        %769 = vmatprep.subr.mxu0 0.0
        %770 = vmatpush2.msra.mxu0 0.0
        %771 = vmatprep.mubr.f32.mxu0 0.0
        %772 = vmatmul.mubr.f32.gmra.mxu0 %v684
        %v773 = vpop.f32.mrf.mxu0
        %v774 = vadd.f32 0.0, %v773
        %v775 = vpop.f32.mrf.mxu0
        %776 = vmatprep.mubr.f32.mxu0 0.0
        %777 = vmatmul.mubr.f32.gmra.mxu0 %v687
        %v778 = vpop.f32.mrf.mxu0
        %v779 = vadd.f32 0.0, %v778
        %v780 = vpop.f32.mrf.mxu0
        %781 = vmatprep.mubr.f32.mxu0 0.0
        %782 = vmatmul.mubr.f32.gmra.mxu0 %v690
        %v783 = vpop.f32.mrf.mxu0
        %v784 = vadd.f32 0.0, %v783
        %v785 = vpop.f32.mrf.mxu0
        %786 = vmatprep.mubr.f32.mxu0 0.0
        %787 = vmatmul.mubr.f32.gmra.mxu0 %v693
        %v788 = vpop.f32.mrf.mxu0
        %v789 = vadd.f32 0.0, %v788
        %v790 = vpop.f32.mrf.mxu0
        %791 = vmatprep.mubr.f32.mxu0 0.0
        %792 = vmatmul.mubr.f32.gmra.mxu0 %v696
        %v793 = vpop.f32.mrf.mxu0
        %v794 = vadd.f32 0.0, %v793
        %v795 = vpop.f32.mrf.mxu0
        %796 = vmatprep.mubr.f32.mxu0 0.0
        %797 = vmatmul.mubr.f32.gmra.mxu0 %v699
        %v798 = vpop.f32.mrf.mxu0
        %v799 = vadd.f32 0.0, %v798
        %v800 = vpop.f32.mrf.mxu0
        %801 = vmatprep.mubr.f32.mxu0 0.0
        %802 = vmatmul.mubr.f32.gmra.mxu0 %v702
        %v803 = vpop.f32.mrf.mxu0
        %v804 = vadd.f32 0.0, %v803
        %v805 = vpop.f32.mrf.mxu0
        %806 = vmatprep.mubr.f32.mxu0 0.0
        %807 = vmatmul.mubr.f32.gmra.mxu0 %v705
        %v808 = vpop.f32.mrf.mxu0
        %v809 = vadd.f32 0.0, %v808
        %v810 = vpop.f32.mrf.mxu0
        %811 = vdwg.mxu0
        %v812 = vadd.f32 %v411, %v774
        %v813 = vadd.f32 %v412, %v779
        %v814 = vadd.f32 %v413, %v784
        %v815 = vadd.f32 %v414, %v789
        %v816 = vmax.f32 %v812, 0.0
        %v817 = vmax.f32 %v813, 0.0
        %v818 = vmax.f32 %v814, 0.0
        %v819 = vmax.f32 %v815, 0.0
        %820 = vst [vmem:[%s399] sm:$0xff] %v816
        %821 = vst [vmem:[%s399 + $0x8] sm:$0xff] %v817
        %822 = vst [vmem:[%s399 + $0x10] sm:$0xff] %v818
        %823 = vst [vmem:[%s399 + $0x18] sm:$0xff] %v819
        %v824 = vld [vmem:[%s367] sm:$0xff]
        %v825 = vld [vmem:[%s367 + $0x8] sm:$0xff]
        %v826 = vld [vmem:[%s367 + $0x10] sm:$0xff]
        %v827 = vld [vmem:[%s367 + $0x18] sm:$0xff]
        %v828 = vadd.f32 %v824, %v794
        %v829 = vadd.f32 %v825, %v799
        %v830 = vadd.f32 %v826, %v804
        %v831 = vadd.f32 %v827, %v809
        %v832 = vmax.f32 %v828, 0.0
        %v833 = vmax.f32 %v829, 0.0
        %v834 = vmax.f32 %v830, 0.0
        %v835 = vmax.f32 %v831, 0.0
        %836 = vst [vmem:[%s405] sm:$0xff] %v832
        %837 = vst [vmem:[%s405 + $0x8] sm:$0xff] %v833
        %838 = vst [vmem:[%s405 + $0x10] sm:$0xff] %v834
        %839 = vst [vmem:[%s405 + $0x18] sm:$0xff] %v835
        %s840 = sand.u32 %s164, 1
        %s841 = sand.u32 %s164, 1
        %s842 = smul.addr %s841, 32
        %s843 = scalar_lea.vmem [#allocation4], %s842
        %s844 = sand.u32 %s192, 1
        %s845 = sand.u32 %s192, 1
        %s846 = smul.addr %s845, 32
        %s847 = scalar_lea.vmem [#allocation5], %s846
        // Predicated region
        $region117: #{mglnet_forward.3} parent=107 // pred_check
          %p848 = pneg %p174
        $region118: #{mglnet_forward.3} parent=107 // pred_check_branch
          %850 = sbr.rel (%p848) target = $region120
        $region119: #{mglnet_forward.3} parent=107 // pred_region
          %s851 = smul.addr %s22, 8
          %s852 = sadd.s32 %s23, %s851
          %s853 = smul.addr %s852, 8
          %s854 = scalar_lea.vmem %s5, %s853
          // Predicated region
          $region121: #{mglnet_forward.3} parent=119 // pred_check
            _
          $region122: #{mglnet_forward.3} parent=119 // pred_check_branch
            %856 = sbr.rel (0) target = $region124
          $region123: #{mglnet_forward.3} parent=119 // pred_region
            // Predicated region
            $region125: #{mglnet_forward.3} parent=123 // pred_check
              _
            $region126: #{mglnet_forward.3} parent=123 // pred_check_branch
              %858 = sbr.rel (0) target = $region128
            $region127: #{mglnet_forward.3} parent=123 // pred_region
              // Predicated region
              $region140: #{mglnet_forward.3} parent=127 // pred_check
                _
              $region141: #{mglnet_forward.3} parent=127 // pred_check_branch
                %880 = sbr.rel (0) target = $region143
              $region142: #{mglnet_forward.3} parent=127 // pred_region
                loop: start=0, step=1, limit=1
                $region144: #{mglnet_forward.3} parent=142 // loop_pre_header
                  _
                $region145: #{mglnet_forward.3} parent=142 // loop_header
                  %s882 = sphi 0, %s886
                  %p883 = scmp.ge.s32.totalorder %s882, 1
                  %s887 = sphi %s843, %s843
                  %s888 = sphi %s854, %s854
                $region146: #{mglnet_forward.3} parent=142 // loop_header_branch
                  %885 = sbr.rel (%p883) target = $region150
                $region147: #{mglnet_forward.3} parent=142 // loop_body
                  %v889 = vld [vmem:[%s887] sm:$0xff]
                  %890 = vst [vmem:[%s888] sm:$0xff] %v889
                  %v891 = vld [vmem:[%s887 + $0x8] sm:$0xff]
                  %892 = vst [vmem:[%s888 + $0x10] sm:$0xff] %v891
                  %v893 = vld [vmem:[%s887 + $0x10] sm:$0xff]
                  %894 = vst [vmem:[%s888 + $0x20] sm:$0xff] %v893
                  %v895 = vld [vmem:[%s887 + $0x18] sm:$0xff]
                  %896 = vst [vmem:[%s888 + $0x30] sm:$0xff] %v895
                $region148: #{mglnet_forward.3} parent=142 // loop_footer
                  %s886 = sadd.s32 1, %s882
                $region149: #{mglnet_forward.3} parent=142 // loop_footer_branch
                  %881 = sbr.rel target = $region145
                $region150: #{mglnet_forward.3} parent=142 // loop_exit
                  _
              $region143: #{mglnet_forward.3} parent=127 // pred_fallthru
                _
              // Predicated region
              $region151: #{mglnet_forward.3} parent=127 // pred_check
                _
              $region152: #{mglnet_forward.3} parent=127 // pred_check_branch
                %898 = sbr.rel target = $region154
              $region153: #{mglnet_forward.3} parent=127 // pred_region
                _
              $region154: #{mglnet_forward.3} parent=127 // pred_fallthru
                _
            $region128: #{mglnet_forward.3} parent=123 // pred_fallthru
              _
            // Predicated region
            $region129: #{mglnet_forward.3} parent=123 // pred_check
              _
            $region130: #{mglnet_forward.3} parent=123 // pred_check_branch
              %860 = sbr.rel target = $region132
            $region131: #{mglnet_forward.3} parent=123 // pred_region
              %s862 = ssub.s32 256, 1
              loop: start=0, step=1, limit=1
              $region133: #{mglnet_forward.3} parent=131 // loop_pre_header
                _
              $region134: #{mglnet_forward.3} parent=131 // loop_header
                %s864 = sphi 0, %s868
                %p865 = scmp.ge.s32.totalorder %s864, 1
                %s869 = sphi %s843, %s843
                %s870 = sphi %s854, %s854
              $region135: #{mglnet_forward.3} parent=131 // loop_header_branch
                %867 = sbr.rel (%p865) target = $region139
              $region136: #{mglnet_forward.3} parent=131 // loop_body
                %v871 = vld [vmem:[%s869] sm:%s862]
                %872 = vst [vmem:[%s870] sm:%s862] %v871
                %v873 = vld [vmem:[%s869 + $0x8] sm:%s862]
                %874 = vst [vmem:[%s870 + $0x10] sm:%s862] %v873
                %v875 = vld [vmem:[%s869 + $0x10] sm:%s862]
                %876 = vst [vmem:[%s870 + $0x20] sm:%s862] %v875
                %v877 = vld [vmem:[%s869 + $0x18] sm:%s862]
                %878 = vst [vmem:[%s870 + $0x30] sm:%s862] %v877
              $region137: #{mglnet_forward.3} parent=131 // loop_footer
                %s868 = sadd.s32 1, %s864
              $region138: #{mglnet_forward.3} parent=131 // loop_footer_branch
                %863 = sbr.rel target = $region134
              $region139: #{mglnet_forward.3} parent=131 // loop_exit
                _
            $region132: #{mglnet_forward.3} parent=123 // pred_fallthru
              _
          $region124: #{mglnet_forward.3} parent=119 // pred_fallthru
            _
          %899 = vnop
        $region120: #{mglnet_forward.3} parent=107 // pred_fallthru
          _
        // Predicated region
        $region155: #{mglnet_forward.3} parent=107 // pred_check
          %p900 = pneg %p202
        $region156: #{mglnet_forward.3} parent=107 // pred_check_branch
          %902 = sbr.rel (%p900) target = $region158
        $region157: #{mglnet_forward.3} parent=107 // pred_region
          %s903 = smul.addr %s22, 8
          %s904 = sadd.s32 %s23, %s903
          %s905 = smul.addr %s904, 8
          %s906 = scalar_lea.vmem %s6, %s905
          // Predicated region
          $region159: #{mglnet_forward.3} parent=157 // pred_check
            _
          $region160: #{mglnet_forward.3} parent=157 // pred_check_branch
            %908 = sbr.rel (0) target = $region162
          $region161: #{mglnet_forward.3} parent=157 // pred_region
            // Predicated region
            $region163: #{mglnet_forward.3} parent=161 // pred_check
              _
            $region164: #{mglnet_forward.3} parent=161 // pred_check_branch
              %910 = sbr.rel (0) target = $region166
            $region165: #{mglnet_forward.3} parent=161 // pred_region
              // Predicated region
              $region178: #{mglnet_forward.3} parent=165 // pred_check
                _
              $region179: #{mglnet_forward.3} parent=165 // pred_check_branch
                %932 = sbr.rel (0) target = $region181
              $region180: #{mglnet_forward.3} parent=165 // pred_region
                loop: start=0, step=1, limit=1
                $region182: #{mglnet_forward.3} parent=180 // loop_pre_header
                  _
                $region183: #{mglnet_forward.3} parent=180 // loop_header
                  %s934 = sphi 0, %s938
                  %p935 = scmp.ge.s32.totalorder %s934, 1
                  %s939 = sphi %s847, %s847
                  %s940 = sphi %s906, %s906
                $region184: #{mglnet_forward.3} parent=180 // loop_header_branch
                  %937 = sbr.rel (%p935) target = $region188
                $region185: #{mglnet_forward.3} parent=180 // loop_body
                  %v941 = vld [vmem:[%s939] sm:$0xff]
                  %942 = vst [vmem:[%s940] sm:$0xff] %v941
                  %v943 = vld [vmem:[%s939 + $0x8] sm:$0xff]
                  %944 = vst [vmem:[%s940 + $0x10] sm:$0xff] %v943
                  %v945 = vld [vmem:[%s939 + $0x10] sm:$0xff]
                  %946 = vst [vmem:[%s940 + $0x20] sm:$0xff] %v945
                  %v947 = vld [vmem:[%s939 + $0x18] sm:$0xff]
                  %948 = vst [vmem:[%s940 + $0x30] sm:$0xff] %v947
                $region186: #{mglnet_forward.3} parent=180 // loop_footer
                  %s938 = sadd.s32 1, %s934
                $region187: #{mglnet_forward.3} parent=180 // loop_footer_branch
                  %933 = sbr.rel target = $region183
                $region188: #{mglnet_forward.3} parent=180 // loop_exit
                  _
              $region181: #{mglnet_forward.3} parent=165 // pred_fallthru
                _
              // Predicated region
              $region189: #{mglnet_forward.3} parent=165 // pred_check
                _
              $region190: #{mglnet_forward.3} parent=165 // pred_check_branch
                %950 = sbr.rel target = $region192
              $region191: #{mglnet_forward.3} parent=165 // pred_region
                _
              $region192: #{mglnet_forward.3} parent=165 // pred_fallthru
                _
            $region166: #{mglnet_forward.3} parent=161 // pred_fallthru
              _
            // Predicated region
            $region167: #{mglnet_forward.3} parent=161 // pred_check
              _
            $region168: #{mglnet_forward.3} parent=161 // pred_check_branch
              %912 = sbr.rel target = $region170
            $region169: #{mglnet_forward.3} parent=161 // pred_region
              %s914 = ssub.s32 256, 1
              loop: start=0, step=1, limit=1
              $region171: #{mglnet_forward.3} parent=169 // loop_pre_header
                _
              $region172: #{mglnet_forward.3} parent=169 // loop_header
                %s916 = sphi 0, %s920
                %p917 = scmp.ge.s32.totalorder %s916, 1
                %s921 = sphi %s847, %s847
                %s922 = sphi %s906, %s906
              $region173: #{mglnet_forward.3} parent=169 // loop_header_branch
                %919 = sbr.rel (%p917) target = $region177
              $region174: #{mglnet_forward.3} parent=169 // loop_body
                %v923 = vld [vmem:[%s921] sm:%s914]
                %924 = vst [vmem:[%s922] sm:%s914] %v923
                %v925 = vld [vmem:[%s921 + $0x8] sm:%s914]
                %926 = vst [vmem:[%s922 + $0x10] sm:%s914] %v925
                %v927 = vld [vmem:[%s921 + $0x10] sm:%s914]
                %928 = vst [vmem:[%s922 + $0x20] sm:%s914] %v927
                %v929 = vld [vmem:[%s921 + $0x18] sm:%s914]
                %930 = vst [vmem:[%s922 + $0x30] sm:%s914] %v929
              $region175: #{mglnet_forward.3} parent=169 // loop_footer
                %s920 = sadd.s32 1, %s916
              $region176: #{mglnet_forward.3} parent=169 // loop_footer_branch
                %915 = sbr.rel target = $region172
              $region177: #{mglnet_forward.3} parent=169 // loop_exit
                _
            $region170: #{mglnet_forward.3} parent=161 // pred_fallthru
              _
          $region162: #{mglnet_forward.3} parent=157 // pred_fallthru
            _
          %951 = vnop
        $region158: #{mglnet_forward.3} parent=107 // pred_fallthru
          _
      $region108: #{mglnet_forward.3} parent=5 // pred_fallthru
        _
      %p952 = scmp.le.s32.totalorder 2, %s13
      // Predicated region
      $region193: #{mglnet_forward.3} parent=5 // pred_check
        %p953 = pneg %p952
      $region194: #{mglnet_forward.3} parent=5 // pred_check_branch
        %955 = sbr.rel (%p953) target = $region196
      $region195: #{mglnet_forward.3} parent=5 // pred_region
        %s956 = ssub.s32 %s13, 2
        // Predicated region
        $region197: #{mglnet_forward.3} parent=195 // pred_check
          %p957 = pneg %p180
        $region198: #{mglnet_forward.3} parent=195 // pred_check_branch
          %959 = sbr.rel (%p957) target = $region200
        $region199: #{mglnet_forward.3} parent=195 // pred_region
          %s960 = sand.u32 %s165, 1
          %s961 = sand.u32 %s165, 1
          %s962 = smul.addr %s961, 32
          %s963 = scalar_lea.vmem [#allocation4], %s962
        $region200: #{mglnet_forward.3} parent=195 // pred_fallthru
          _
        // Predicated region
        $region201: #{mglnet_forward.3} parent=195 // pred_check
          %p964 = pneg %p208
        $region202: #{mglnet_forward.3} parent=195 // pred_check_branch
          %966 = sbr.rel (%p964) target = $region204
        $region203: #{mglnet_forward.3} parent=195 // pred_region
          %s967 = sand.u32 %s193, 1
          %s968 = sand.u32 %s193, 1
          %s969 = smul.addr %s968, 32
          %s970 = scalar_lea.vmem [#allocation5], %s969
        $region204: #{mglnet_forward.3} parent=195 // pred_fallthru
          _
      $region196: #{mglnet_forward.3} parent=5 // pred_fallthru
        _
    $region6: #{mglnet_forward.3} parent=1 // loop_footer
      %s17 = sadd.s32 1, %s13
    $region7: #{mglnet_forward.3} parent=1 // loop_footer_branch
      %12 = sbr.rel target = $region3
    $region8: #{mglnet_forward.3} parent=1 // loop_exit
      _

</llo_original>
